<compile_context>
chip_gen: v7x
topology: tpu7x:2x2x1
jax: 0.10.0
libtpu: 0.0.40
codegen_flags: <defaults>
</compile_context>

<pallas_src>
import functools

import jax
import jax.numpy as jnp
from jax.experimental import pallas as pl
from jax.experimental.pallas import tpu as pltpu

KERNEL_SIZE = 3


def _round_up(x, m):
    return (x + m - 1) // m * m


# ----------------------------------------------------------------------------
# Fused whole-model kernel: one grid step == one batch element.
# ----------------------------------------------------------------------------
def _ecgformer_kernel(*refs, levels, Lp, PAD):
    f32 = jnp.float32
    refs = list(refs)
    tmp_ref = refs.pop()          # scratch: conv1 output      (C_max, PAD + Lp)
    act_ref = refs.pop()          # scratch: level activation  (C_max, PAD + Lp)
    o_ref = refs.pop()            # output block               (1, C_last, Lp)
    it = iter(refs)

    tem_ref = next(it)            # (1, in_t,  Lp) channels-first
    spa_ref = next(it)            # (1, in_s1, Lp) channels-first
    ws1t = next(it)[...]; bs1 = next(it)[...]
    ws2t = next(it)[...]; bs2 = next(it)[...]
    wtt = next(it)[...]; bt = next(it)[...]
    wftt = next(it)[...]; wfst = next(it)[...]; bf = next(it)[...]

    # Zero the causal left margins.  They are never written below and are read
    # as the zero history of every level.  Done unconditionally (16 KB store)
    # so it stays correct if the "parallel" batch axis is core-sharded (v7x).
    c_scr = act_ref.shape[0]
    act_ref[pl.ds(0, c_scr), pl.ds(0, PAD)] = jnp.zeros((c_scr, PAD), f32)
    tmp_ref[pl.ds(0, c_scr), pl.ds(0, PAD)] = jnp.zeros((c_scr, PAD), f32)

    # ----- Encoder: both branches + fusion linear, channels-first, no transpose
    spa = jnp.maximum(jnp.dot(ws1t, spa_ref[0], preferred_element_type=f32) + bs1, 0.0)
    spa = jnp.maximum(jnp.dot(ws2t, spa, preferred_element_type=f32) + bs2, 0.0)
    tem = jnp.maximum(jnp.dot(wtt, tem_ref[0], preferred_element_type=f32) + bt, 0.0)
    # fusion linear on concat([tem, spa]) expressed as two dots on the split wf
    x = jnp.dot(wftt, tem, preferred_element_type=f32)
    x = x + jnp.dot(wfst, spa, preferred_element_type=f32)
    x = jnp.maximum(x + bf, 0.0)                                  # (out_f, Lp)
    act_ref[pl.ds(0, x.shape[0]), pl.ds(PAD, Lp)] = x             # aligned store

    # ----- Dilated causal conv = K accumulated dots on shifted ref slices.
    def causal_conv(src_ref, c_src, w_ref, b, dilation):
        k_taps = w_ref.shape[0]
        acc = jnp.dot(w_ref[k_taps - 1],
                      src_ref[pl.ds(0, c_src), pl.ds(PAD, Lp)],
                      preferred_element_type=f32)
        for k in range(k_taps - 1):
            s = (k_taps - 1 - k) * dilation            # causal shift of tap k
            acc = acc + jnp.dot(
                w_ref[k], src_ref[pl.ds(0, c_src), pl.ds(PAD - s, Lp)],
                preferred_element_type=f32)
        return acc + b

    n_levels = len(levels)
    for i, (c_in, c_out, dilation, has_down) in enumerate(levels):
        w1_ref = next(it); b1 = next(it)[...]
        w2_ref = next(it); b2 = next(it)[...]
        if has_down:
            wd = next(it)[...]; bd = next(it)[...]

        out1 = jnp.maximum(causal_conv(act_ref, c_in, w1_ref, b1, dilation), 0.0)
        tmp_ref[pl.ds(0, c_out), pl.ds(PAD, Lp)] = out1
        y = causal_conv(tmp_ref, c_out, w2_ref, b2, dilation)
        if has_down:                                   # 1x1 downsample residual
            res = jnp.dot(wd, act_ref[pl.ds(0, c_in), pl.ds(PAD, Lp)],
                          preferred_element_type=f32) + bd
        else:
            res = act_ref[pl.ds(0, c_in), pl.ds(PAD, Lp)]
        y = jnp.maximum(y + res, 0.0)                  # (c_out, Lp)

        if i == n_levels - 1:
            o_ref[0] = y.astype(o_ref.dtype)           # lane-dense final store
        else:
            act_ref[pl.ds(0, c_out), pl.ds(PAD, Lp)] = y


# ----------------------------------------------------------------------------
# ECGFormer forward: one pallas_call for the whole model, grid over batch.
# ----------------------------------------------------------------------------
def ecgformer_forward(temporal, spatial, params):
    B, L, in_t = temporal.shape
    in_s1 = spatial.shape[-1]
    enc = params["enc"]
    out_t = enc["wt"].shape[1]
    out_f = enc["wf"].shape[1]

    # Host-side one-time layout work (inputs are the smallest tensors in the
    # model; weights are tiny): channels-first + right pad time to 128 lanes.
    Lp = max(128, _round_up(L, 128))

    def to_cf(a):                                      # (B, L, C) -> (B, C, Lp)
        a = jnp.transpose(a, (0, 2, 1))
        return jnp.pad(a, ((0, 0), (0, 0), (0, Lp - L)))

    tem_cf = to_cf(temporal)
    spa_cf = to_cf(spatial)

    col = lambda b: b.reshape(-1, 1)
    enc_args = [enc["ws1"].T, col(enc["bs1"]),
                enc["ws2"].T, col(enc["bs2"]),
                enc["wt"].T, col(enc["bt"]),
                enc["wf"][:out_t, :].T, enc["wf"][out_t:, :].T, col(enc["bf"])]

    levels, tcn_args = [], []
    c_in = out_f
    max_shift = 0
    for i, blk in enumerate(params["tcn"]):
        d = 2 ** i
        c_out = blk["w1"].shape[1]
        has_down = blk["wd"] is not None
        levels.append((c_in, c_out, d, has_down))
        max_shift = max(max_shift, (KERNEL_SIZE - 1) * d)
        # TODO(synk): dropout layers omitted (eval-mode identity)
        tcn_args += [blk["w1"], col(blk["b1"]), blk["w2"], col(blk["b2"])]
        if has_down:
            tcn_args += [blk["wd"], col(blk["bd"])]
        c_in = c_out
    c_last = c_in

    PAD = max(128, _round_up(max_shift, 128))      # 128-aligned zero left margin
    C_max = _round_up(max([out_f] + [c for (_, c, _, _) in levels]), 8)

    args = [tem_cf, spa_cf] + enc_args + tcn_args

    def _const_map(nd):
        return lambda b: (0,) * nd                 # weights stay resident

    in_specs = [pl.BlockSpec((1, in_t, Lp), lambda b: (b, 0, 0)),
                pl.BlockSpec((1, in_s1, Lp), lambda b: (b, 0, 0))]
    for a in enc_args + tcn_args:
        in_specs.append(pl.BlockSpec(a.shape, _const_map(a.ndim)))

    kern = functools.partial(_ecgformer_kernel,
                             levels=tuple(levels), Lp=Lp, PAD=PAD)
    y = pl.pallas_call(
        kern,
        grid=(B,),
        in_specs=in_specs,
        out_specs=pl.BlockSpec((1, c_last, Lp), lambda b: (b, 0, 0)),
        out_shape=jax.ShapeDtypeStruct((B, c_last, Lp), jnp.float32),
        scratch_shapes=[pltpu.VMEM((C_max, PAD + Lp), jnp.float32),
                        pltpu.VMEM((C_max, PAD + Lp), jnp.float32)],
        compiler_params=pltpu.CompilerParams(
            dimension_semantics=("parallel",),     # batch sharding on v7x 2 TCs
            vmem_limit_bytes=32 * 1024 * 1024),    # far above per-batch footprint
    )(*args)
    return y[:, :, :L]                             # drop the right time padding


# ----------------------------------------------------------------------------
# Pure-JAX reference (for correctness check)
# ----------------------------------------------------------------------------
def ecgformer_reference(temporal, spatial, params):
    B, L, _ = temporal.shape
    enc = params["enc"]

    def lin(z, w, b):
        return jnp.maximum(z @ w + b, 0.0)

    spa = lin(spatial.reshape(B * L, -1), enc["ws1"], enc["bs1"])
    spa = lin(spa, enc["ws2"], enc["bs2"])
    tem = lin(temporal.reshape(B * L, -1), enc["wt"], enc["bt"])
    fus = lin(jnp.concatenate([tem, spa], -1), enc["wf"], enc["bf"])
    x = fus.reshape(B, L, -1).transpose(0, 2, 1)

    for i, blk in enumerate(params["tcn"]):
        d = 2 ** i
        pad = (KERNEL_SIZE - 1) * d

        def conv(z, w, b):
            zp = jnp.pad(z, ((0, 0), (0, 0), (pad, 0)))
            out = jnp.zeros((z.shape[0], w.shape[1], z.shape[2]), jnp.float32)
            for k in range(KERNEL_SIZE):
                out = out + jnp.einsum("oc,bcl->bol", w[k],
                                       zp[:, :, k * d: k * d + z.shape[2]])
            return out + b[None, :, None]

        out1 = jnp.maximum(conv(x, blk["w1"], blk["b1"]), 0.0)
        out2 = conv(out1, blk["w2"], blk["b2"])
        if blk["wd"] is not None:
            res = jnp.einsum("oc,bcl->bol", blk["wd"], x) + blk["bd"][None, :, None]
        else:
            res = x
        x = jnp.maximum(out2 + res, 0.0)
    return x


# ----------------------------------------------------------------------------
# Deterministic parameter init + driver
# ----------------------------------------------------------------------------
def init_params(key, encoder_parameter, num_inputs, num_channels):
    (in_s1, out_s1, in_s2, out_s2, in_t, out_t, in_f, out_f) = encoder_parameter
    ks = iter(jax.random.split(key, 64))

    def nrm(shape, scale=0.05):
        return scale * jax.random.normal(next(ks), shape, jnp.float32)

    enc = dict(
        ws1=nrm((in_s1, out_s1)), bs1=jnp.zeros((out_s1,), jnp.float32),
        ws2=nrm((in_s2, out_s2)), bs2=jnp.zeros((out_s2,), jnp.float32),
        wt=nrm((in_t, out_t)), bt=jnp.zeros((out_t,), jnp.float32),
        wf=nrm((in_f, out_f)), bf=jnp.zeros((out_f,), jnp.float32),
    )
    tcn = []
    c_in = num_inputs
    for c_out in num_channels:
        blk = dict(
            w1=nrm((KERNEL_SIZE, c_out, c_in)), b1=nrm((c_out,), 0.01),
            w2=nrm((KERNEL_SIZE, c_out, c_out)), b2=nrm((c_out,), 0.01),
            wd=nrm((c_out, c_in)) if c_in != c_out else None,
            bd=nrm((c_out,), 0.01) if c_in != c_out else None,
        )
        tcn.append(blk)
        c_in = c_out
    return dict(enc=enc, tcn=tcn)


if __name__ == "__main__":
    B, L = 2, 16
    encoder_parameter = (12, 16, 16, 16, 8, 16, 32, 24)   # spa1, spa2, tem, final
    num_inputs = encoder_parameter[-1]                     # 24 fused channels
    num_channels = [24, 8]   # level 0: identity residual; level 1: 1x1 downsample

    key = jax.random.PRNGKey(0)
    k_t, k_s, k_p = jax.random.split(key, 3)
    temporal_data = jax.random.normal(k_t, (B, L, encoder_parameter[4]), jnp.float32)
    spatial_data = jax.random.normal(k_s, (B, L, encoder_parameter[0]), jnp.float32)
    params = init_params(k_p, encoder_parameter, num_inputs, num_channels)

    out = jax.jit(ecgformer_forward)(temporal_data, spatial_data, params)
    out = jax.block_until_ready(out)

    ref = jax.block_until_ready(ecgformer_reference(temporal_data, spatial_data, params))
    assert out.shape == (B, num_channels[-1], L), out.shape
    max_err = float(jnp.max(jnp.abs(out - ref)))
    assert jnp.allclose(out, ref, rtol=1e-3, atol=1e-3), max_err

    print("KERNEL_OK")
</pallas_src>

<mosaic_0001>
module attributes {stable_mosaic.version = 11 : i64} {
  func.func @_ecgformer_kernel(%arg0: i32, %arg1: memref<1x8x128xf32, #tpu.memory_space<vmem>>, %arg2: memref<1x12x128xf32, #tpu.memory_space<vmem>>, %arg3: memref<16x12xf32, #tpu.memory_space<vmem>>, %arg4: memref<16x1xf32, #tpu.memory_space<vmem>>, %arg5: memref<16x16xf32, #tpu.memory_space<vmem>>, %arg6: memref<16x1xf32, #tpu.memory_space<vmem>>, %arg7: memref<16x8xf32, #tpu.memory_space<vmem>>, %arg8: memref<16x1xf32, #tpu.memory_space<vmem>>, %arg9: memref<24x16xf32, #tpu.memory_space<vmem>>, %arg10: memref<24x16xf32, #tpu.memory_space<vmem>>, %arg11: memref<24x1xf32, #tpu.memory_space<vmem>>, %arg12: memref<3x24x24xf32, #tpu.memory_space<vmem>>, %arg13: memref<24x1xf32, #tpu.memory_space<vmem>>, %arg14: memref<3x24x24xf32, #tpu.memory_space<vmem>>, %arg15: memref<24x1xf32, #tpu.memory_space<vmem>>, %arg16: memref<3x8x24xf32, #tpu.memory_space<vmem>>, %arg17: memref<8x1xf32, #tpu.memory_space<vmem>>, %arg18: memref<3x8x8xf32, #tpu.memory_space<vmem>>, %arg19: memref<8x1xf32, #tpu.memory_space<vmem>>, %arg20: memref<8x24xf32, #tpu.memory_space<vmem>>, %arg21: memref<8x1xf32, #tpu.memory_space<vmem>>, %arg22: memref<1x8x128xf32, #tpu.memory_space<vmem>>, %arg23: memref<24x256xf32, #tpu.memory_space<vmem>>, %arg24: memref<24x256xf32, #tpu.memory_space<vmem>>) attributes {dimension_semantics = [#tpu.dimension_semantics<parallel>], iteration_bounds = array<i64: 2>, scalar_prefetch = 0 : i64, scratch_operands = 2 : i64, tpu.core_type = #tpu.core_type<tc>, window_params = [{transform_indices = @transform_0, window_bounds = array<i64: 1, 8, 128>}, {transform_indices = @transform_1, window_bounds = array<i64: 1, 12, 128>}, {pipeline_mode = #tpu.pipeline_mode<synchronous>, transform_indices = @transform_2, window_bounds = array<i64: 16, 12>}, {pipeline_mode = #tpu.pipeline_mode<synchronous>, transform_indices = @transform_3, window_bounds = array<i64: 16, 1>}, {pipeline_mode = #tpu.pipeline_mode<synchronous>, transform_indices = @transform_4, window_bounds = array<i64: 16, 16>}, {pipeline_mode = #tpu.pipeline_mode<synchronous>, transform_indices = @transform_5, window_bounds = array<i64: 16, 1>}, {pipeline_mode = #tpu.pipeline_mode<synchronous>, transform_indices = @transform_6, window_bounds = array<i64: 16, 8>}, {pipeline_mode = #tpu.pipeline_mode<synchronous>, transform_indices = @transform_7, window_bounds = array<i64: 16, 1>}, {pipeline_mode = #tpu.pipeline_mode<synchronous>, transform_indices = @transform_8, window_bounds = array<i64: 24, 16>}, {pipeline_mode = #tpu.pipeline_mode<synchronous>, transform_indices = @transform_9, window_bounds = array<i64: 24, 16>}, {pipeline_mode = #tpu.pipeline_mode<synchronous>, transform_indices = @transform_10, window_bounds = array<i64: 24, 1>}, {pipeline_mode = #tpu.pipeline_mode<synchronous>, transform_indices = @transform_11, window_bounds = array<i64: 3, 24, 24>}, {pipeline_mode = #tpu.pipeline_mode<synchronous>, transform_indices = @transform_12, window_bounds = array<i64: 24, 1>}, {pipeline_mode = #tpu.pipeline_mode<synchronous>, transform_indices = @transform_13, window_bounds = array<i64: 3, 24, 24>}, {pipeline_mode = #tpu.pipeline_mode<synchronous>, transform_indices = @transform_14, window_bounds = array<i64: 24, 1>}, {pipeline_mode = #tpu.pipeline_mode<synchronous>, transform_indices = @transform_15, window_bounds = array<i64: 3, 8, 24>}, {pipeline_mode = #tpu.pipeline_mode<synchronous>, transform_indices = @transform_16, window_bounds = array<i64: 8, 1>}, {pipeline_mode = #tpu.pipeline_mode<synchronous>, transform_indices = @transform_17, window_bounds = array<i64: 3, 8, 8>}, {pipeline_mode = #tpu.pipeline_mode<synchronous>, transform_indices = @transform_18, window_bounds = array<i64: 8, 1>}, {pipeline_mode = #tpu.pipeline_mode<synchronous>, transform_indices = @transform_19, window_bounds = array<i64: 8, 24>}, {pipeline_mode = #tpu.pipeline_mode<synchronous>, transform_indices = @transform_20, window_bounds = array<i64: 8, 1>}, {transform_indices = @transform_21, window_bounds = array<i64: 1, 8, 128>}]} {
    %c0 = arith.constant 0 : index
    %c0_0 = arith.constant 0 : index
    %0 = vector.load %arg3[%c0, %c0_0] : memref<16x12xf32, #tpu.memory_space<vmem>>, vector<16x12xf32>
    %c0_1 = arith.constant 0 : index
    %c0_2 = arith.constant 0 : index
    %1 = vector.load %arg4[%c0_1, %c0_2] : memref<16x1xf32, #tpu.memory_space<vmem>>, vector<16x1xf32>
    %c0_3 = arith.constant 0 : index
    %c0_4 = arith.constant 0 : index
    %2 = vector.load %arg5[%c0_3, %c0_4] : memref<16x16xf32, #tpu.memory_space<vmem>>, vector<16x16xf32>
    %c0_5 = arith.constant 0 : index
    %c0_6 = arith.constant 0 : index
    %3 = vector.load %arg6[%c0_5, %c0_6] : memref<16x1xf32, #tpu.memory_space<vmem>>, vector<16x1xf32>
    %c0_7 = arith.constant 0 : index
    %c0_8 = arith.constant 0 : index
    %4 = vector.load %arg7[%c0_7, %c0_8] : memref<16x8xf32, #tpu.memory_space<vmem>>, vector<16x8xf32>
    %c0_9 = arith.constant 0 : index
    %c0_10 = arith.constant 0 : index
    %5 = vector.load %arg8[%c0_9, %c0_10] : memref<16x1xf32, #tpu.memory_space<vmem>>, vector<16x1xf32>
    %c0_11 = arith.constant 0 : index
    %c0_12 = arith.constant 0 : index
    %6 = vector.load %arg9[%c0_11, %c0_12] : memref<24x16xf32, #tpu.memory_space<vmem>>, vector<24x16xf32>
    %c0_13 = arith.constant 0 : index
    %c0_14 = arith.constant 0 : index
    %7 = vector.load %arg10[%c0_13, %c0_14] : memref<24x16xf32, #tpu.memory_space<vmem>>, vector<24x16xf32>
    %c0_15 = arith.constant 0 : index
    %c0_16 = arith.constant 0 : index
    %8 = vector.load %arg11[%c0_15, %c0_16] : memref<24x1xf32, #tpu.memory_space<vmem>>, vector<24x1xf32>
    %cst = arith.constant 0.000000e+00 : f32
    %9 = vector.broadcast %cst : f32 to vector<24x128xf32>
    %c0_17 = arith.constant 0 : index
    %c0_18 = arith.constant 0 : index
    %10 = vector.load %arg23[%c0_17, %c0_18] : memref<24x256xf32, #tpu.memory_space<vmem>>, vector<24x128xf32>
    tpu.vector_store %arg23[%c0_17, %c0_18], %9 {strides = array<i32>} : memref<24x256xf32, #tpu.memory_space<vmem>>, vector<24x128xf32>,
    %cst_19 = arith.constant 0.000000e+00 : f32
    %11 = vector.broadcast %cst_19 : f32 to vector<24x128xf32>
    %c0_20 = arith.constant 0 : index
    %c0_21 = arith.constant 0 : index
    %12 = vector.load %arg24[%c0_20, %c0_21] : memref<24x256xf32, #tpu.memory_space<vmem>>, vector<24x128xf32>
    tpu.vector_store %arg24[%c0_20, %c0_21], %11 {strides = array<i32>} : memref<24x256xf32, #tpu.memory_space<vmem>>, vector<24x128xf32>,
    %c0_22 = arith.constant 0 : index
    %c0_23 = arith.constant 0 : index
    %c0_24 = arith.constant 0 : index
    %13 = vector.load %arg2[%c0_22, %c0_23, %c0_24] : memref<1x12x128xf32, #tpu.memory_space<vmem>>, vector<1x12x128xf32>
    %14 = vector.shape_cast %13 : vector<1x12x128xf32> to vector<12x128xf32>
    %cst_25 = arith.constant dense<0.000000e+00> : vector<16x128xf32>
    %15 = tpu.matmul %0, %14, %cst_25 {dimension_numbers = #tpu.dot_dimension_numbers<[1], [0], [0], [1], [0, 0, 1, 1], [], []>} : vector<16x12xf32>, vector<12x128xf32>, vector<16x128xf32> -> vector<16x128xf32>
    %16 = vector.broadcast %1 : vector<16x1xf32> to vector<16x128xf32>
    %17 = arith.addf %15, %16 : vector<16x128xf32>
    %cst_26 = arith.constant 0.000000e+00 : f32
    %18 = vector.broadcast %cst_26 : f32 to vector<16x128xf32>
    %19 = arith.maximumf %17, %18 : vector<16x128xf32>
    %cst_27 = arith.constant dense<0.000000e+00> : vector<16x128xf32>
    %20 = tpu.matmul %2, %19, %cst_27 {dimension_numbers = #tpu.dot_dimension_numbers<[1], [0], [0], [1], [0, 0, 1, 1], [], []>} : vector<16x16xf32>, vector<16x128xf32>, vector<16x128xf32> -> vector<16x128xf32>
    %21 = vector.broadcast %3 : vector<16x1xf32> to vector<16x128xf32>
    %22 = arith.addf %20, %21 : vector<16x128xf32>
    %cst_28 = arith.constant 0.000000e+00 : f32
    %23 = vector.broadcast %cst_28 : f32 to vector<16x128xf32>
    %24 = arith.maximumf %22, %23 : vector<16x128xf32>
    %c0_29 = arith.constant 0 : index
    %c0_30 = arith.constant 0 : index
    %c0_31 = arith.constant 0 : index
    %25 = vector.load %arg1[%c0_29, %c0_30, %c0_31] : memref<1x8x128xf32, #tpu.memory_space<vmem>>, vector<1x8x128xf32>
    %26 = vector.shape_cast %25 : vector<1x8x128xf32> to vector<8x128xf32>
    %cst_32 = arith.constant dense<0.000000e+00> : vector<16x128xf32>
    %27 = tpu.matmul %4, %26, %cst_32 {dimension_numbers = #tpu.dot_dimension_numbers<[1], [0], [0], [1], [0, 0, 1, 1], [], []>} : vector<16x8xf32>, vector<8x128xf32>, vector<16x128xf32> -> vector<16x128xf32>
    %28 = vector.broadcast %5 : vector<16x1xf32> to vector<16x128xf32>
    %29 = arith.addf %27, %28 : vector<16x128xf32>
    %cst_33 = arith.constant 0.000000e+00 : f32
    %30 = vector.broadcast %cst_33 : f32 to vector<16x128xf32>
    %31 = arith.maximumf %29, %30 : vector<16x128xf32>
    %cst_34 = arith.constant dense<0.000000e+00> : vector<24x128xf32>
    %32 = tpu.matmul %6, %31, %cst_34 {dimension_numbers = #tpu.dot_dimension_numbers<[1], [0], [0], [1], [0, 0, 1, 1], [], []>} : vector<24x16xf32>, vector<16x128xf32>, vector<24x128xf32> -> vector<24x128xf32>
    %cst_35 = arith.constant dense<0.000000e+00> : vector<24x128xf32>
    %33 = tpu.matmul %7, %24, %cst_35 {dimension_numbers = #tpu.dot_dimension_numbers<[1], [0], [0], [1], [0, 0, 1, 1], [], []>} : vector<24x16xf32>, vector<16x128xf32>, vector<24x128xf32> -> vector<24x128xf32>
    %34 = arith.addf %32, %33 : vector<24x128xf32>
    %35 = vector.broadcast %8 : vector<24x1xf32> to vector<24x128xf32>
    %36 = arith.addf %34, %35 : vector<24x128xf32>
    %cst_36 = arith.constant 0.000000e+00 : f32
    %37 = vector.broadcast %cst_36 : f32 to vector<24x128xf32>
    %38 = arith.maximumf %36, %37 : vector<24x128xf32>
    %c0_37 = arith.constant 0 : index
    %c128 = arith.constant 128 : index
    %39 = vector.load %arg23[%c0_37, %c128] : memref<24x256xf32, #tpu.memory_space<vmem>>, vector<24x128xf32>
    tpu.vector_store %arg23[%c0_37, %c128], %38 {strides = array<i32>} : memref<24x256xf32, #tpu.memory_space<vmem>>, vector<24x128xf32>,
    %c0_38 = arith.constant 0 : index
    %c0_39 = arith.constant 0 : index
    %40 = vector.load %arg13[%c0_38, %c0_39] : memref<24x1xf32, #tpu.memory_space<vmem>>, vector<24x1xf32>
    %c0_40 = arith.constant 0 : index
    %c0_41 = arith.constant 0 : index
    %41 = vector.load %arg15[%c0_40, %c0_41] : memref<24x1xf32, #tpu.memory_space<vmem>>, vector<24x1xf32>
    %c2 = arith.constant 2 : index
    %c0_42 = arith.constant 0 : index
    %c0_43 = arith.constant 0 : index
    %42 = vector.load %arg12[%c2, %c0_42, %c0_43] : memref<3x24x24xf32, #tpu.memory_space<vmem>>, vector<1x24x24xf32>
    %43 = vector.shape_cast %42 : vector<1x24x24xf32> to vector<24x24xf32>
    %c0_44 = arith.constant 0 : index
    %c128_45 = arith.constant 128 : index
    %44 = vector.load %arg23[%c0_44, %c128_45] : memref<24x256xf32, #tpu.memory_space<vmem>>, vector<24x128xf32>
    %cst_46 = arith.constant dense<0.000000e+00> : vector<24x128xf32>
    %45 = tpu.matmul %43, %44, %cst_46 {dimension_numbers = #tpu.dot_dimension_numbers<[1], [0], [0], [1], [0, 0, 1, 1], [], []>} : vector<24x24xf32>, vector<24x128xf32>, vector<24x128xf32> -> vector<24x128xf32>
    %c0_47 = arith.constant 0 : index
    %c0_48 = arith.constant 0 : index
    %c0_49 = arith.constant 0 : index
    %46 = vector.load %arg12[%c0_47, %c0_48, %c0_49] : memref<3x24x24xf32, #tpu.memory_space<vmem>>, vector<1x24x24xf32>
    %47 = vector.shape_cast %46 : vector<1x24x24xf32> to vector<24x24xf32>
    %c0_50 = arith.constant 0 : index
    %c126 = arith.constant 126 : index
    %48 = vector.load %arg23[%c0_50, %c126] : memref<24x256xf32, #tpu.memory_space<vmem>>, vector<24x128xf32>
    %cst_51 = arith.constant dense<0.000000e+00> : vector<24x128xf32>
    %49 = tpu.matmul %47, %48, %cst_51 {dimension_numbers = #tpu.dot_dimension_numbers<[1], [0], [0], [1], [0, 0, 1, 1], [], []>} : vector<24x24xf32>, vector<24x128xf32>, vector<24x128xf32> -> vector<24x128xf32>
    %50 = arith.addf %45, %49 : vector<24x128xf32>
    %c1 = arith.constant 1 : index
    %c0_52 = arith.constant 0 : index
    %c0_53 = arith.constant 0 : index
    %51 = vector.load %arg12[%c1, %c0_52, %c0_53] : memref<3x24x24xf32, #tpu.memory_space<vmem>>, vector<1x24x24xf32>
    %52 = vector.shape_cast %51 : vector<1x24x24xf32> to vector<24x24xf32>
    %c0_54 = arith.constant 0 : index
    %c127 = arith.constant 127 : index
    %53 = vector.load %arg23[%c0_54, %c127] : memref<24x256xf32, #tpu.memory_space<vmem>>, vector<24x128xf32>
    %cst_55 = arith.constant dense<0.000000e+00> : vector<24x128xf32>
    %54 = tpu.matmul %52, %53, %cst_55 {dimension_numbers = #tpu.dot_dimension_numbers<[1], [0], [0], [1], [0, 0, 1, 1], [], []>} : vector<24x24xf32>, vector<24x128xf32>, vector<24x128xf32> -> vector<24x128xf32>
    %55 = arith.addf %50, %54 : vector<24x128xf32>
    %56 = vector.broadcast %40 : vector<24x1xf32> to vector<24x128xf32>
    %57 = arith.addf %55, %56 : vector<24x128xf32>
    %cst_56 = arith.constant 0.000000e+00 : f32
    %58 = vector.broadcast %cst_56 : f32 to vector<24x128xf32>
    %59 = arith.maximumf %57, %58 : vector<24x128xf32>
    %c0_57 = arith.constant 0 : index
    %c128_58 = arith.constant 128 : index
    %60 = vector.load %arg24[%c0_57, %c128_58] : memref<24x256xf32, #tpu.memory_space<vmem>>, vector<24x128xf32>
    tpu.vector_store %arg24[%c0_57, %c128_58], %59 {strides = array<i32>} : memref<24x256xf32, #tpu.memory_space<vmem>>, vector<24x128xf32>,
    %c2_59 = arith.constant 2 : index
    %c0_60 = arith.constant 0 : index
    %c0_61 = arith.constant 0 : index
    %61 = vector.load %arg14[%c2_59, %c0_60, %c0_61] : memref<3x24x24xf32, #tpu.memory_space<vmem>>, vector<1x24x24xf32>
    %62 = vector.shape_cast %61 : vector<1x24x24xf32> to vector<24x24xf32>
    %c0_62 = arith.constant 0 : index
    %c128_63 = arith.constant 128 : index
    %63 = vector.load %arg24[%c0_62, %c128_63] : memref<24x256xf32, #tpu.memory_space<vmem>>, vector<24x128xf32>
    %cst_64 = arith.constant dense<0.000000e+00> : vector<24x128xf32>
    %64 = tpu.matmul %62, %63, %cst_64 {dimension_numbers = #tpu.dot_dimension_numbers<[1], [0], [0], [1], [0, 0, 1, 1], [], []>} : vector<24x24xf32>, vector<24x128xf32>, vector<24x128xf32> -> vector<24x128xf32>
    %c0_65 = arith.constant 0 : index
    %c0_66 = arith.constant 0 : index
    %c0_67 = arith.constant 0 : index
    %65 = vector.load %arg14[%c0_65, %c0_66, %c0_67] : memref<3x24x24xf32, #tpu.memory_space<vmem>>, vector<1x24x24xf32>
    %66 = vector.shape_cast %65 : vector<1x24x24xf32> to vector<24x24xf32>
    %c0_68 = arith.constant 0 : index
    %c126_69 = arith.constant 126 : index
    %67 = vector.load %arg24[%c0_68, %c126_69] : memref<24x256xf32, #tpu.memory_space<vmem>>, vector<24x128xf32>
    %cst_70 = arith.constant dense<0.000000e+00> : vector<24x128xf32>
    %68 = tpu.matmul %66, %67, %cst_70 {dimension_numbers = #tpu.dot_dimension_numbers<[1], [0], [0], [1], [0, 0, 1, 1], [], []>} : vector<24x24xf32>, vector<24x128xf32>, vector<24x128xf32> -> vector<24x128xf32>
    %69 = arith.addf %64, %68 : vector<24x128xf32>
    %c1_71 = arith.constant 1 : index
    %c0_72 = arith.constant 0 : index
    %c0_73 = arith.constant 0 : index
    %70 = vector.load %arg14[%c1_71, %c0_72, %c0_73] : memref<3x24x24xf32, #tpu.memory_space<vmem>>, vector<1x24x24xf32>
    %71 = vector.shape_cast %70 : vector<1x24x24xf32> to vector<24x24xf32>
    %c0_74 = arith.constant 0 : index
    %c127_75 = arith.constant 127 : index
    %72 = vector.load %arg24[%c0_74, %c127_75] : memref<24x256xf32, #tpu.memory_space<vmem>>, vector<24x128xf32>
    %cst_76 = arith.constant dense<0.000000e+00> : vector<24x128xf32>
    %73 = tpu.matmul %71, %72, %cst_76 {dimension_numbers = #tpu.dot_dimension_numbers<[1], [0], [0], [1], [0, 0, 1, 1], [], []>} : vector<24x24xf32>, vector<24x128xf32>, vector<24x128xf32> -> vector<24x128xf32>
    %74 = arith.addf %69, %73 : vector<24x128xf32>
    %75 = vector.broadcast %41 : vector<24x1xf32> to vector<24x128xf32>
    %76 = arith.addf %74, %75 : vector<24x128xf32>
    %c0_77 = arith.constant 0 : index
    %c128_78 = arith.constant 128 : index
    %77 = vector.load %arg23[%c0_77, %c128_78] : memref<24x256xf32, #tpu.memory_space<vmem>>, vector<24x128xf32>
    %78 = arith.addf %76, %77 : vector<24x128xf32>
    %cst_79 = arith.constant 0.000000e+00 : f32
    %79 = vector.broadcast %cst_79 : f32 to vector<24x128xf32>
    %80 = arith.maximumf %78, %79 : vector<24x128xf32>
    %c0_80 = arith.constant 0 : index
    %c128_81 = arith.constant 128 : index
    %81 = vector.load %arg23[%c0_80, %c128_81] : memref<24x256xf32, #tpu.memory_space<vmem>>, vector<24x128xf32>
    tpu.vector_store %arg23[%c0_80, %c128_81], %80 {strides = array<i32>} : memref<24x256xf32, #tpu.memory_space<vmem>>, vector<24x128xf32>,
    %c0_82 = arith.constant 0 : index
    %c0_83 = arith.constant 0 : index
    %82 = vector.load %arg17[%c0_82, %c0_83] : memref<8x1xf32, #tpu.memory_space<vmem>>, vector<8x1xf32>
    %c0_84 = arith.constant 0 : index
    %c0_85 = arith.constant 0 : index
    %83 = vector.load %arg19[%c0_84, %c0_85] : memref<8x1xf32, #tpu.memory_space<vmem>>, vector<8x1xf32>
    %c0_86 = arith.constant 0 : index
    %c0_87 = arith.constant 0 : index
    %84 = vector.load %arg20[%c0_86, %c0_87] : memref<8x24xf32, #tpu.memory_space<vmem>>, vector<8x24xf32>
    %c0_88 = arith.constant 0 : index
    %c0_89 = arith.constant 0 : index
    %85 = vector.load %arg21[%c0_88, %c0_89] : memref<8x1xf32, #tpu.memory_space<vmem>>, vector<8x1xf32>
    %c2_90 = arith.constant 2 : index
    %c0_91 = arith.constant 0 : index
    %c0_92 = arith.constant 0 : index
    %86 = vector.load %arg16[%c2_90, %c0_91, %c0_92] : memref<3x8x24xf32, #tpu.memory_space<vmem>>, vector<1x8x24xf32>
    %87 = vector.shape_cast %86 : vector<1x8x24xf32> to vector<8x24xf32>
    %c0_93 = arith.constant 0 : index
    %c128_94 = arith.constant 128 : index
    %88 = vector.load %arg23[%c0_93, %c128_94] : memref<24x256xf32, #tpu.memory_space<vmem>>, vector<24x128xf32>
    %cst_95 = arith.constant dense<0.000000e+00> : vector<8x128xf32>
    %89 = tpu.matmul %87, %88, %cst_95 {dimension_numbers = #tpu.dot_dimension_numbers<[1], [0], [0], [1], [0, 0, 1, 1], [], []>} : vector<8x24xf32>, vector<24x128xf32>, vector<8x128xf32> -> vector<8x128xf32>
    %c0_96 = arith.constant 0 : index
    %c0_97 = arith.constant 0 : index
    %c0_98 = arith.constant 0 : index
    %90 = vector.load %arg16[%c0_96, %c0_97, %c0_98] : memref<3x8x24xf32, #tpu.memory_space<vmem>>, vector<1x8x24xf32>
    %91 = vector.shape_cast %90 : vector<1x8x24xf32> to vector<8x24xf32>
    %c0_99 = arith.constant 0 : index
    %c124 = arith.constant 124 : index
    %92 = vector.load %arg23[%c0_99, %c124] : memref<24x256xf32, #tpu.memory_space<vmem>>, vector<24x128xf32>
    %cst_100 = arith.constant dense<0.000000e+00> : vector<8x128xf32>
    %93 = tpu.matmul %91, %92, %cst_100 {dimension_numbers = #tpu.dot_dimension_numbers<[1], [0], [0], [1], [0, 0, 1, 1], [], []>} : vector<8x24xf32>, vector<24x128xf32>, vector<8x128xf32> -> vector<8x128xf32>
    %94 = arith.addf %89, %93 : vector<8x128xf32>
    %c1_101 = arith.constant 1 : index
    %c0_102 = arith.constant 0 : index
    %c0_103 = arith.constant 0 : index
    %95 = vector.load %arg16[%c1_101, %c0_102, %c0_103] : memref<3x8x24xf32, #tpu.memory_space<vmem>>, vector<1x8x24xf32>
    %96 = vector.shape_cast %95 : vector<1x8x24xf32> to vector<8x24xf32>
    %c0_104 = arith.constant 0 : index
    %c126_105 = arith.constant 126 : index
    %97 = vector.load %arg23[%c0_104, %c126_105] : memref<24x256xf32, #tpu.memory_space<vmem>>, vector<24x128xf32>
    %cst_106 = arith.constant dense<0.000000e+00> : vector<8x128xf32>
    %98 = tpu.matmul %96, %97, %cst_106 {dimension_numbers = #tpu.dot_dimension_numbers<[1], [0], [0], [1], [0, 0, 1, 1], [], []>} : vector<8x24xf32>, vector<24x128xf32>, vector<8x128xf32> -> vector<8x128xf32>
    %99 = arith.addf %94, %98 : vector<8x128xf32>
    %100 = vector.broadcast %82 : vector<8x1xf32> to vector<8x128xf32>
    %101 = arith.addf %99, %100 : vector<8x128xf32>
    %cst_107 = arith.constant 0.000000e+00 : f32
    %102 = vector.broadcast %cst_107 : f32 to vector<8x128xf32>
    %103 = arith.maximumf %101, %102 : vector<8x128xf32>
    %c0_108 = arith.constant 0 : index
    %c128_109 = arith.constant 128 : index
    %104 = vector.load %arg24[%c0_108, %c128_109] : memref<24x256xf32, #tpu.memory_space<vmem>>, vector<8x128xf32>
    tpu.vector_store %arg24[%c0_108, %c128_109], %103 {strides = array<i32>} : memref<24x256xf32, #tpu.memory_space<vmem>>, vector<8x128xf32>,
    %c2_110 = arith.constant 2 : index
    %c0_111 = arith.constant 0 : index
    %c0_112 = arith.constant 0 : index
    %105 = vector.load %arg18[%c2_110, %c0_111, %c0_112] : memref<3x8x8xf32, #tpu.memory_space<vmem>>, vector<1x8x8xf32>
    %106 = vector.shape_cast %105 : vector<1x8x8xf32> to vector<8x8xf32>
    %c0_113 = arith.constant 0 : index
    %c128_114 = arith.constant 128 : index
    %107 = vector.load %arg24[%c0_113, %c128_114] : memref<24x256xf32, #tpu.memory_space<vmem>>, vector<8x128xf32>
    %cst_115 = arith.constant dense<0.000000e+00> : vector<8x128xf32>
    %108 = tpu.matmul %106, %107, %cst_115 {dimension_numbers = #tpu.dot_dimension_numbers<[1], [0], [0], [1], [0, 0, 1, 1], [], []>} : vector<8x8xf32>, vector<8x128xf32>, vector<8x128xf32> -> vector<8x128xf32>
    %c0_116 = arith.constant 0 : index
    %c0_117 = arith.constant 0 : index
    %c0_118 = arith.constant 0 : index
    %109 = vector.load %arg18[%c0_116, %c0_117, %c0_118] : memref<3x8x8xf32, #tpu.memory_space<vmem>>, vector<1x8x8xf32>
    %110 = vector.shape_cast %109 : vector<1x8x8xf32> to vector<8x8xf32>
    %c0_119 = arith.constant 0 : index
    %c124_120 = arith.constant 124 : index
    %111 = vector.load %arg24[%c0_119, %c124_120] : memref<24x256xf32, #tpu.memory_space<vmem>>, vector<8x128xf32>
    %cst_121 = arith.constant dense<0.000000e+00> : vector<8x128xf32>
    %112 = tpu.matmul %110, %111, %cst_121 {dimension_numbers = #tpu.dot_dimension_numbers<[1], [0], [0], [1], [0, 0, 1, 1], [], []>} : vector<8x8xf32>, vector<8x128xf32>, vector<8x128xf32> -> vector<8x128xf32>
    %113 = arith.addf %108, %112 : vector<8x128xf32>
    %c1_122 = arith.constant 1 : index
    %c0_123 = arith.constant 0 : index
    %c0_124 = arith.constant 0 : index
    %114 = vector.load %arg18[%c1_122, %c0_123, %c0_124] : memref<3x8x8xf32, #tpu.memory_space<vmem>>, vector<1x8x8xf32>
    %115 = vector.shape_cast %114 : vector<1x8x8xf32> to vector<8x8xf32>
    %c0_125 = arith.constant 0 : index
    %c126_126 = arith.constant 126 : index
    %116 = vector.load %arg24[%c0_125, %c126_126] : memref<24x256xf32, #tpu.memory_space<vmem>>, vector<8x128xf32>
    %cst_127 = arith.constant dense<0.000000e+00> : vector<8x128xf32>
    %117 = tpu.matmul %115, %116, %cst_127 {dimension_numbers = #tpu.dot_dimension_numbers<[1], [0], [0], [1], [0, 0, 1, 1], [], []>} : vector<8x8xf32>, vector<8x128xf32>, vector<8x128xf32> -> vector<8x128xf32>
    %118 = arith.addf %113, %117 : vector<8x128xf32>
    %119 = vector.broadcast %83 : vector<8x1xf32> to vector<8x128xf32>
    %120 = arith.addf %118, %119 : vector<8x128xf32>
    %c0_128 = arith.constant 0 : index
    %c128_129 = arith.constant 128 : index
    %121 = vector.load %arg23[%c0_128, %c128_129] : memref<24x256xf32, #tpu.memory_space<vmem>>, vector<24x128xf32>
    %cst_130 = arith.constant dense<0.000000e+00> : vector<8x128xf32>
    %122 = tpu.matmul %84, %121, %cst_130 {dimension_numbers = #tpu.dot_dimension_numbers<[1], [0], [0], [1], [0, 0, 1, 1], [], []>} : vector<8x24xf32>, vector<24x128xf32>, vector<8x128xf32> -> vector<8x128xf32>
    %123 = vector.broadcast %85 : vector<8x1xf32> to vector<8x128xf32>
    %124 = arith.addf %122, %123 : vector<8x128xf32>
    %125 = arith.addf %120, %124 : vector<8x128xf32>
    %cst_131 = arith.constant 0.000000e+00 : f32
    %126 = vector.broadcast %cst_131 : f32 to vector<8x128xf32>
    %127 = arith.maximumf %125, %126 : vector<8x128xf32>
    %c0_132 = arith.constant 0 : index
    %c0_133 = arith.constant 0 : index
    %c0_134 = arith.constant 0 : index
    %128 = vector.load %arg22[%c0_132, %c0_133, %c0_134] : memref<1x8x128xf32, #tpu.memory_space<vmem>>, vector<1x8x128xf32>
    %129 = vector.shape_cast %128 : vector<1x8x128xf32> to vector<8x128xf32>
    %130 = vector.shape_cast %127 : vector<8x128xf32> to vector<1x8x128xf32>
    tpu.vector_store %arg22[%c0_132, %c0_133, %c0_134], %130 {strides = array<i32>} : memref<1x8x128xf32, #tpu.memory_space<vmem>>, vector<1x8x128xf32>,
    return
  }
  func.func @transform_0(%arg0: i32) -> (i32, i32, i32) {
    %c0_i32 = arith.constant 0 : i32
    %c0_i32_0 = arith.constant 0 : i32
    %c0_i32_1 = arith.constant 0 : i32
    return %arg0, %c0_i32, %c0_i32_0 : i32, i32, i32
  }
  func.func @transform_1(%arg0: i32) -> (i32, i32, i32) {
    %c0_i32 = arith.constant 0 : i32
    %c0_i32_0 = arith.constant 0 : i32
    %c0_i32_1 = arith.constant 0 : i32
    return %arg0, %c0_i32, %c0_i32_0 : i32, i32, i32
  }
  func.func @transform_2(%arg0: i32) -> (i32, i32) {
    %c0_i32 = arith.constant 0 : i32
    %c0_i32_0 = arith.constant 0 : i32
    %c0_i32_1 = arith.constant 0 : i32
    return %c0_i32, %c0_i32_0 : i32, i32
  }
  func.func @transform_3(%arg0: i32) -> (i32, i32) {
    %c0_i32 = arith.constant 0 : i32
    %c0_i32_0 = arith.constant 0 : i32
    %c0_i32_1 = arith.constant 0 : i32
    return %c0_i32, %c0_i32_0 : i32, i32
  }
  func.func @transform_4(%arg0: i32) -> (i32, i32) {
    %c0_i32 = arith.constant 0 : i32
    %c0_i32_0 = arith.constant 0 : i32
    %c0_i32_1 = arith.constant 0 : i32
    return %c0_i32, %c0_i32_0 : i32, i32
  }
  func.func @transform_5(%arg0: i32) -> (i32, i32) {
    %c0_i32 = arith.constant 0 : i32
    %c0_i32_0 = arith.constant 0 : i32
    %c0_i32_1 = arith.constant 0 : i32
    return %c0_i32, %c0_i32_0 : i32, i32
  }
  func.func @transform_6(%arg0: i32) -> (i32, i32) {
    %c0_i32 = arith.constant 0 : i32
    %c0_i32_0 = arith.constant 0 : i32
    %c0_i32_1 = arith.constant 0 : i32
    return %c0_i32, %c0_i32_0 : i32, i32
  }
  func.func @transform_7(%arg0: i32) -> (i32, i32) {
    %c0_i32 = arith.constant 0 : i32
    %c0_i32_0 = arith.constant 0 : i32
    %c0_i32_1 = arith.constant 0 : i32
    return %c0_i32, %c0_i32_0 : i32, i32
  }
  func.func @transform_8(%arg0: i32) -> (i32, i32) {
    %c0_i32 = arith.constant 0 : i32
    %c0_i32_0 = arith.constant 0 : i32
    %c0_i32_1 = arith.constant 0 : i32
    return %c0_i32, %c0_i32_0 : i32, i32
  }
  func.func @transform_9(%arg0: i32) -> (i32, i32) {
    %c0_i32 = arith.constant 0 : i32
    %c0_i32_0 = arith.constant 0 : i32
    %c0_i32_1 = arith.constant 0 : i32
    return %c0_i32, %c0_i32_0 : i32, i32
  }
  func.func @transform_10(%arg0: i32) -> (i32, i32) {
    %c0_i32 = arith.constant 0 : i32
    %c0_i32_0 = arith.constant 0 : i32
    %c0_i32_1 = arith.constant 0 : i32
    return %c0_i32, %c0_i32_0 : i32, i32
  }
  func.func @transform_11(%arg0: i32) -> (i32, i32, i32) {
    %c0_i32 = arith.constant 0 : i32
    %c0_i32_0 = arith.constant 0 : i32
    %c0_i32_1 = arith.constant 0 : i32
    %c0_i32_2 = arith.constant 0 : i32
    return %c0_i32, %c0_i32_0, %c0_i32_1 : i32, i32, i32
  }
  func.func @transform_12(%arg0: i32) -> (i32, i32) {
    %c0_i32 = arith.constant 0 : i32
    %c0_i32_0 = arith.constant 0 : i32
    %c0_i32_1 = arith.constant 0 : i32
    return %c0_i32, %c0_i32_0 : i32, i32
  }
  func.func @transform_13(%arg0: i32) -> (i32, i32, i32) {
    %c0_i32 = arith.constant 0 : i32
    %c0_i32_0 = arith.constant 0 : i32
    %c0_i32_1 = arith.constant 0 : i32
    %c0_i32_2 = arith.constant 0 : i32
    return %c0_i32, %c0_i32_0, %c0_i32_1 : i32, i32, i32
  }
  func.func @transform_14(%arg0: i32) -> (i32, i32) {
    %c0_i32 = arith.constant 0 : i32
    %c0_i32_0 = arith.constant 0 : i32
    %c0_i32_1 = arith.constant 0 : i32
    return %c0_i32, %c0_i32_0 : i32, i32
  }
  func.func @transform_15(%arg0: i32) -> (i32, i32, i32) {
    %c0_i32 = arith.constant 0 : i32
    %c0_i32_0 = arith.constant 0 : i32
    %c0_i32_1 = arith.constant 0 : i32
    %c0_i32_2 = arith.constant 0 : i32
    return %c0_i32, %c0_i32_0, %c0_i32_1 : i32, i32, i32
  }
  func.func @transform_16(%arg0: i32) -> (i32, i32) {
    %c0_i32 = arith.constant 0 : i32
    %c0_i32_0 = arith.constant 0 : i32
    %c0_i32_1 = arith.constant 0 : i32
    return %c0_i32, %c0_i32_0 : i32, i32
  }
  func.func @transform_17(%arg0: i32) -> (i32, i32, i32) {
    %c0_i32 = arith.constant 0 : i32
    %c0_i32_0 = arith.constant 0 : i32
    %c0_i32_1 = arith.constant 0 : i32
    %c0_i32_2 = arith.constant 0 : i32
    return %c0_i32, %c0_i32_0, %c0_i32_1 : i32, i32, i32
  }
  func.func @transform_18(%arg0: i32) -> (i32, i32) {
    %c0_i32 = arith.constant 0 : i32
    %c0_i32_0 = arith.constant 0 : i32
    %c0_i32_1 = arith.constant 0 : i32
    return %c0_i32, %c0_i32_0 : i32, i32
  }
  func.func @transform_19(%arg0: i32) -> (i32, i32) {
    %c0_i32 = arith.constant 0 : i32
    %c0_i32_0 = arith.constant 0 : i32
    %c0_i32_1 = arith.constant 0 : i32
    return %c0_i32, %c0_i32_0 : i32, i32
  }
  func.func @transform_20(%arg0: i32) -> (i32, i32) {
    %c0_i32 = arith.constant 0 : i32
    %c0_i32_0 = arith.constant 0 : i32
    %c0_i32_1 = arith.constant 0 : i32
    return %c0_i32, %c0_i32_0 : i32, i32
  }
  func.func @transform_21(%arg0: i32) -> (i32, i32, i32) {
    %c0_i32 = arith.constant 0 : i32
    %c0_i32_0 = arith.constant 0 : i32
    %c0_i32_1 = arith.constant 0 : i32
    return %arg0, %c0_i32, %c0_i32_0 : i32, i32, i32
  }
}

</mosaic_0001>

<llo_original>
// kernel: ecgformer_forward.1
$region0: #{ecgformer_forward.1}
  #allocation0 [shape = 'u32[]', space=smem, size = 0x4, offset = 0x4, fixed_abs, tag = 'smem constant byte address 0x4 - core index']
  #allocation1 [shape = 'u32[144,128]{1,0:T(1,128)}', space=vmem, size = 0x12000, scoped, tag = 'internal scratch']
  #allocation2 [shape = 'f32[24,256]{1,0:T(8,128)}', space=vmem, size = 0x6000, scoped, tag = 'scratch operand']
  #allocation3 [shape = 'f32[24,256]{1,0:T(8,128)}', space=vmem, size = 0x6000, scoped, tag = 'scratch operand']
  %s0 = inlined_call_operand.vmem [shape: f32[2,8,128], index: 0, kind: input, shape index: {}]
  %s1 = inlined_call_operand.vmem [shape: f32[2,12,128], index: 1, kind: input, shape index: {}]
  %s2 = inlined_call_operand.vmem [shape: f32[16,12], index: 2, kind: input, shape index: {}]
  %s3 = inlined_call_operand.vmem [shape: f32[16,1], index: 3, kind: input, shape index: {}]
  %s4 = inlined_call_operand.vmem [shape: f32[16,16], index: 4, kind: input, shape index: {}]
  %s5 = inlined_call_operand.vmem [shape: f32[16,1], index: 5, kind: input, shape index: {}]
  %s6 = inlined_call_operand.vmem [shape: f32[16,8], index: 6, kind: input, shape index: {}]
  %s7 = inlined_call_operand.vmem [shape: f32[16,1], index: 7, kind: input, shape index: {}]
  %s8 = inlined_call_operand.vmem [shape: f32[24,16], index: 8, kind: input, shape index: {}]
  %s9 = inlined_call_operand.vmem [shape: f32[24,16], index: 9, kind: input, shape index: {}]
  %s10 = inlined_call_operand.vmem [shape: f32[24,1], index: 10, kind: input, shape index: {}]
  %s11 = inlined_call_operand.vmem [shape: f32[3,24,24], index: 11, kind: input, shape index: {}]
  %s12 = inlined_call_operand.vmem [shape: f32[24,1], index: 12, kind: input, shape index: {}]
  %s13 = inlined_call_operand.vmem [shape: f32[3,24,24], index: 13, kind: input, shape index: {}]
  %s14 = inlined_call_operand.vmem [shape: f32[24,1], index: 14, kind: input, shape index: {}]
  %s15 = inlined_call_operand.vmem [shape: f32[3,8,24], index: 15, kind: input, shape index: {}]
  %s16 = inlined_call_operand.vmem [shape: f32[8,1], index: 16, kind: input, shape index: {}]
  %s17 = inlined_call_operand.vmem [shape: f32[3,8,8], index: 17, kind: input, shape index: {}]
  %s18 = inlined_call_operand.vmem [shape: f32[8,1], index: 18, kind: input, shape index: {}]
  %s19 = inlined_call_operand.vmem [shape: f32[8,24], index: 19, kind: input, shape index: {}]
  %s20 = inlined_call_operand.vmem [shape: f32[8,1], index: 20, kind: input, shape index: {}]
  %s21 = inlined_call_operand.hbm [shape: f32[2,8,128], index: 21, kind: output, shape index: {}]
  %s22 = sld [smem:[#allocation0]]
  $region117: #{ecgformer_forward.1} parent=0
    _
  %s24 = ssub.s32 1, %s22
  %s25 = scalar_select 0, %s24, %s22
  $region1: #{ecgformer_forward.1} parent=0
    #allocation4 [shape = 'u8[8192]{0}', space=vmem, size = 0x2000, scoped, tag = 'output window, operand 0']
    #allocation5 [shape = 's32[2]{0}', space=sflag, size = 0x8, scoped, tag = 'scoped memory for ecgformer_forward.1']
    %26 = vsyncpa [#allocation5], 0
    %s27 = scalar_lea.sflag [#allocation5], 1
    %28 = vsyncpa %s27, 0
    loop: start=0, step=1, limit=4
    $region2: #{ecgformer_forward.1} parent=1 // loop_pre_header
      _
    $region3: #{ecgformer_forward.1} parent=1 // loop_header
      %s30 = sphi 0, %s34
      %p31 = scmp.ge.s32.totalorder %s30, 4
      %s40 = sphi 0, %s42
      %s43 = sphi 0, %s40
      %s44 = sphi 0, %s43
      %s60 = sphi 0, %s44
      %s66 = sphi 0, %s68
      %s69 = sphi 0, %s66
      %s70 = sphi 0, %s69
      %s86 = sphi 0, %s70
      %s90 = sphi 0, %s90
      %s92 = sphi 0, %s90
      %s93 = sphi 0, %s92
      %s107 = sphi 0, %s93
      %s111 = sphi 0, %s111
      %s113 = sphi 0, %s111
      %s114 = sphi 0, %s113
      %s128 = sphi 0, %s114
      %s132 = sphi 0, %s132
      %s134 = sphi 0, %s132
      %s135 = sphi 0, %s134
      %s149 = sphi 0, %s135
      %s153 = sphi 0, %s153
      %s155 = sphi 0, %s153
      %s156 = sphi 0, %s155
      %s170 = sphi 0, %s156
      %s174 = sphi 0, %s174
      %s176 = sphi 0, %s174
      %s177 = sphi 0, %s176
      %s191 = sphi 0, %s177
      %s195 = sphi 0, %s195
      %s197 = sphi 0, %s195
      %s198 = sphi 0, %s197
      %s212 = sphi 0, %s198
      %s216 = sphi 0, %s216
      %s218 = sphi 0, %s216
      %s219 = sphi 0, %s218
      %s233 = sphi 0, %s219
      %s237 = sphi 0, %s237
      %s239 = sphi 0, %s237
      %s240 = sphi 0, %s239
      %s254 = sphi 0, %s240
      %s258 = sphi 0, %s258
      %s260 = sphi 0, %s258
      %s261 = sphi 0, %s260
      %s275 = sphi 0, %s261
      %s279 = sphi 0, %s279
      %s281 = sphi 0, %s279
      %s282 = sphi 0, %s281
      %s296 = sphi 0, %s282
      %s300 = sphi 0, %s300
      %s302 = sphi 0, %s300
      %s303 = sphi 0, %s302
      %s317 = sphi 0, %s303
      %s321 = sphi 0, %s321
      %s323 = sphi 0, %s321
      %s324 = sphi 0, %s323
      %s338 = sphi 0, %s324
      %s342 = sphi 0, %s342
      %s344 = sphi 0, %s342
      %s345 = sphi 0, %s344
      %s359 = sphi 0, %s345
      %s363 = sphi 0, %s363
      %s365 = sphi 0, %s363
      %s366 = sphi 0, %s365
      %s380 = sphi 0, %s366
      %s384 = sphi 0, %s384
      %s386 = sphi 0, %s384
      %s387 = sphi 0, %s386
      %s401 = sphi 0, %s387
      %s405 = sphi 0, %s405
      %s407 = sphi 0, %s405
      %s408 = sphi 0, %s407
      %s422 = sphi 0, %s408
      %s426 = sphi 0, %s426
      %s428 = sphi 0, %s426
      %s429 = sphi 0, %s428
      %s443 = sphi 0, %s429
      %s447 = sphi 0, %s447
      %s449 = sphi 0, %s447
      %s450 = sphi 0, %s449
      %s464 = sphi 0, %s450
      %s468 = sphi 0, %s468
      %s470 = sphi 0, %s468
      %s471 = sphi 0, %s470
      %s485 = sphi 0, %s471
      %s491 = sphi 0, %s493
      %s494 = sphi 0, %s491
      %s495 = sphi 0, %s494
      %s511 = sphi 0, %s495
    $region4: #{ecgformer_forward.1} parent=1 // loop_header_branch
      %33 = sbr.rel (%p31) target = $region8
    $region5: #{ecgformer_forward.1} parent=1 // loop_body
      %s35 = ssub.s32 %s30, 1
      %s36 = ssub.s32 %s30, 2
      %s37 = sadd.s32 %s30, 1
      %s38 = ssub.s32 %s30, %s37
      %p39 = scmp.eq.s32.totalorder %s38, 0
      %s41 = sadd.s32 %s40, 1
      %s42 = scalar_select %p39, %s40, %s41
      %p45 = pneg %p39
      %p46 = scmp.eq.s32.totalorder %s30, 1
      %p47 = por %p45, %p46
      %p48 = scmp.ne.s32.totalorder %s40, %s43
      %p49 = scmp.eq.s32.totalorder %s30, 0
      %p50 = por %p48, %p49
      %p51 = scmp.ne.s32.totalorder %s40, %s43
      %p52 = scmp.eq.s32.totalorder %s35, 1
      %p53 = por %p51, %p52
      %p54 = scmp.ne.s32.totalorder %s43, %s44
      %p55 = scmp.eq.s32.totalorder %s35, 0
      %p56 = por %p54, %p55
      %p57 = scmp.ne.s32.totalorder %s43, %s44
      %p58 = scmp.eq.s32.totalorder %s36, 1
      %p59 = por %p57, %p58
      %p61 = scmp.ne.s32.totalorder %s44, %s60
      %p62 = scmp.eq.s32.totalorder %s36, 0
      %p63 = por %p61, %p62
      %s64 = ssub.s32 %s30, %s37
      %p65 = scmp.eq.s32.totalorder %s64, 0
      %s67 = sadd.s32 %s66, 1
      %s68 = scalar_select %p65, %s66, %s67
      %p71 = pneg %p65
      %p72 = scmp.eq.s32.totalorder %s30, 1
      %p73 = por %p71, %p72
      %p74 = scmp.ne.s32.totalorder %s66, %s69
      %p75 = scmp.eq.s32.totalorder %s30, 0
      %p76 = por %p74, %p75
      %p77 = scmp.ne.s32.totalorder %s66, %s69
      %p78 = scmp.eq.s32.totalorder %s35, 1
      %p79 = por %p77, %p78
      %p80 = scmp.ne.s32.totalorder %s69, %s70
      %p81 = scmp.eq.s32.totalorder %s35, 0
      %p82 = por %p80, %p81
      %p83 = scmp.ne.s32.totalorder %s69, %s70
      %p84 = scmp.eq.s32.totalorder %s36, 1
      %p85 = por %p83, %p84
      %p87 = scmp.ne.s32.totalorder %s70, %s86
      %p88 = scmp.eq.s32.totalorder %s36, 0
      %p89 = por %p87, %p88
      %s91 = sadd.s32 %s90, 1
      %p94 = scmp.eq.s32.totalorder %s30, 1
      %p95 = scmp.ne.s32.totalorder %s90, %s92
      %p96 = scmp.eq.s32.totalorder %s30, 0
      %p97 = por %p95, %p96
      %p98 = scmp.ne.s32.totalorder %s90, %s92
      %p99 = scmp.eq.s32.totalorder %s35, 1
      %p100 = por %p98, %p99
      %p101 = scmp.ne.s32.totalorder %s92, %s93
      %p102 = scmp.eq.s32.totalorder %s35, 0
      %p103 = por %p101, %p102
      %p104 = scmp.ne.s32.totalorder %s92, %s93
      %p105 = scmp.eq.s32.totalorder %s36, 1
      %p106 = por %p104, %p105
      %p108 = scmp.ne.s32.totalorder %s93, %s107
      %p109 = scmp.eq.s32.totalorder %s36, 0
      %p110 = por %p108, %p109
      %s112 = sadd.s32 %s111, 1
      %p115 = scmp.eq.s32.totalorder %s30, 1
      %p116 = scmp.ne.s32.totalorder %s111, %s113
      %p117 = scmp.eq.s32.totalorder %s30, 0
      %p118 = por %p116, %p117
      %p119 = scmp.ne.s32.totalorder %s111, %s113
      %p120 = scmp.eq.s32.totalorder %s35, 1
      %p121 = por %p119, %p120
      %p122 = scmp.ne.s32.totalorder %s113, %s114
      %p123 = scmp.eq.s32.totalorder %s35, 0
      %p124 = por %p122, %p123
      %p125 = scmp.ne.s32.totalorder %s113, %s114
      %p126 = scmp.eq.s32.totalorder %s36, 1
      %p127 = por %p125, %p126
      %p129 = scmp.ne.s32.totalorder %s114, %s128
      %p130 = scmp.eq.s32.totalorder %s36, 0
      %p131 = por %p129, %p130
      %s133 = sadd.s32 %s132, 1
      %p136 = scmp.eq.s32.totalorder %s30, 1
      %p137 = scmp.ne.s32.totalorder %s132, %s134
      %p138 = scmp.eq.s32.totalorder %s30, 0
      %p139 = por %p137, %p138
      %p140 = scmp.ne.s32.totalorder %s132, %s134
      %p141 = scmp.eq.s32.totalorder %s35, 1
      %p142 = por %p140, %p141
      %p143 = scmp.ne.s32.totalorder %s134, %s135
      %p144 = scmp.eq.s32.totalorder %s35, 0
      %p145 = por %p143, %p144
      %p146 = scmp.ne.s32.totalorder %s134, %s135
      %p147 = scmp.eq.s32.totalorder %s36, 1
      %p148 = por %p146, %p147
      %p150 = scmp.ne.s32.totalorder %s135, %s149
      %p151 = scmp.eq.s32.totalorder %s36, 0
      %p152 = por %p150, %p151
      %s154 = sadd.s32 %s153, 1
      %p157 = scmp.eq.s32.totalorder %s30, 1
      %p158 = scmp.ne.s32.totalorder %s153, %s155
      %p159 = scmp.eq.s32.totalorder %s30, 0
      %p160 = por %p158, %p159
      %p161 = scmp.ne.s32.totalorder %s153, %s155
      %p162 = scmp.eq.s32.totalorder %s35, 1
      %p163 = por %p161, %p162
      %p164 = scmp.ne.s32.totalorder %s155, %s156
      %p165 = scmp.eq.s32.totalorder %s35, 0
      %p166 = por %p164, %p165
      %p167 = scmp.ne.s32.totalorder %s155, %s156
      %p168 = scmp.eq.s32.totalorder %s36, 1
      %p169 = por %p167, %p168
      %p171 = scmp.ne.s32.totalorder %s156, %s170
      %p172 = scmp.eq.s32.totalorder %s36, 0
      %p173 = por %p171, %p172
      %s175 = sadd.s32 %s174, 1
      %p178 = scmp.eq.s32.totalorder %s30, 1
      %p179 = scmp.ne.s32.totalorder %s174, %s176
      %p180 = scmp.eq.s32.totalorder %s30, 0
      %p181 = por %p179, %p180
      %p182 = scmp.ne.s32.totalorder %s174, %s176
      %p183 = scmp.eq.s32.totalorder %s35, 1
      %p184 = por %p182, %p183
      %p185 = scmp.ne.s32.totalorder %s176, %s177
      %p186 = scmp.eq.s32.totalorder %s35, 0
      %p187 = por %p185, %p186
      %p188 = scmp.ne.s32.totalorder %s176, %s177
      %p189 = scmp.eq.s32.totalorder %s36, 1
      %p190 = por %p188, %p189
      %p192 = scmp.ne.s32.totalorder %s177, %s191
      %p193 = scmp.eq.s32.totalorder %s36, 0
      %p194 = por %p192, %p193
      %s196 = sadd.s32 %s195, 1
      %p199 = scmp.eq.s32.totalorder %s30, 1
      %p200 = scmp.ne.s32.totalorder %s195, %s197
      %p201 = scmp.eq.s32.totalorder %s30, 0
      %p202 = por %p200, %p201
      %p203 = scmp.ne.s32.totalorder %s195, %s197
      %p204 = scmp.eq.s32.totalorder %s35, 1
      %p205 = por %p203, %p204
      %p206 = scmp.ne.s32.totalorder %s197, %s198
      %p207 = scmp.eq.s32.totalorder %s35, 0
      %p208 = por %p206, %p207
      %p209 = scmp.ne.s32.totalorder %s197, %s198
      %p210 = scmp.eq.s32.totalorder %s36, 1
      %p211 = por %p209, %p210
      %p213 = scmp.ne.s32.totalorder %s198, %s212
      %p214 = scmp.eq.s32.totalorder %s36, 0
      %p215 = por %p213, %p214
      %s217 = sadd.s32 %s216, 1
      %p220 = scmp.eq.s32.totalorder %s30, 1
      %p221 = scmp.ne.s32.totalorder %s216, %s218
      %p222 = scmp.eq.s32.totalorder %s30, 0
      %p223 = por %p221, %p222
      %p224 = scmp.ne.s32.totalorder %s216, %s218
      %p225 = scmp.eq.s32.totalorder %s35, 1
      %p226 = por %p224, %p225
      %p227 = scmp.ne.s32.totalorder %s218, %s219
      %p228 = scmp.eq.s32.totalorder %s35, 0
      %p229 = por %p227, %p228
      %p230 = scmp.ne.s32.totalorder %s218, %s219
      %p231 = scmp.eq.s32.totalorder %s36, 1
      %p232 = por %p230, %p231
      %p234 = scmp.ne.s32.totalorder %s219, %s233
      %p235 = scmp.eq.s32.totalorder %s36, 0
      %p236 = por %p234, %p235
      %s238 = sadd.s32 %s237, 1
      %p241 = scmp.eq.s32.totalorder %s30, 1
      %p242 = scmp.ne.s32.totalorder %s237, %s239
      %p243 = scmp.eq.s32.totalorder %s30, 0
      %p244 = por %p242, %p243
      %p245 = scmp.ne.s32.totalorder %s237, %s239
      %p246 = scmp.eq.s32.totalorder %s35, 1
      %p247 = por %p245, %p246
      %p248 = scmp.ne.s32.totalorder %s239, %s240
      %p249 = scmp.eq.s32.totalorder %s35, 0
      %p250 = por %p248, %p249
      %p251 = scmp.ne.s32.totalorder %s239, %s240
      %p252 = scmp.eq.s32.totalorder %s36, 1
      %p253 = por %p251, %p252
      %p255 = scmp.ne.s32.totalorder %s240, %s254
      %p256 = scmp.eq.s32.totalorder %s36, 0
      %p257 = por %p255, %p256
      %s259 = sadd.s32 %s258, 1
      %p262 = scmp.eq.s32.totalorder %s30, 1
      %p263 = scmp.ne.s32.totalorder %s258, %s260
      %p264 = scmp.eq.s32.totalorder %s30, 0
      %p265 = por %p263, %p264
      %p266 = scmp.ne.s32.totalorder %s258, %s260
      %p267 = scmp.eq.s32.totalorder %s35, 1
      %p268 = por %p266, %p267
      %p269 = scmp.ne.s32.totalorder %s260, %s261
      %p270 = scmp.eq.s32.totalorder %s35, 0
      %p271 = por %p269, %p270
      %p272 = scmp.ne.s32.totalorder %s260, %s261
      %p273 = scmp.eq.s32.totalorder %s36, 1
      %p274 = por %p272, %p273
      %p276 = scmp.ne.s32.totalorder %s261, %s275
      %p277 = scmp.eq.s32.totalorder %s36, 0
      %p278 = por %p276, %p277
      %s280 = sadd.s32 %s279, 1
      %p283 = scmp.eq.s32.totalorder %s30, 1
      %p284 = scmp.ne.s32.totalorder %s279, %s281
      %p285 = scmp.eq.s32.totalorder %s30, 0
      %p286 = por %p284, %p285
      %p287 = scmp.ne.s32.totalorder %s279, %s281
      %p288 = scmp.eq.s32.totalorder %s35, 1
      %p289 = por %p287, %p288
      %p290 = scmp.ne.s32.totalorder %s281, %s282
      %p291 = scmp.eq.s32.totalorder %s35, 0
      %p292 = por %p290, %p291
      %p293 = scmp.ne.s32.totalorder %s281, %s282
      %p294 = scmp.eq.s32.totalorder %s36, 1
      %p295 = por %p293, %p294
      %p297 = scmp.ne.s32.totalorder %s282, %s296
      %p298 = scmp.eq.s32.totalorder %s36, 0
      %p299 = por %p297, %p298
      %s301 = sadd.s32 %s300, 1
      %p304 = scmp.eq.s32.totalorder %s30, 1
      %p305 = scmp.ne.s32.totalorder %s300, %s302
      %p306 = scmp.eq.s32.totalorder %s30, 0
      %p307 = por %p305, %p306
      %p308 = scmp.ne.s32.totalorder %s300, %s302
      %p309 = scmp.eq.s32.totalorder %s35, 1
      %p310 = por %p308, %p309
      %p311 = scmp.ne.s32.totalorder %s302, %s303
      %p312 = scmp.eq.s32.totalorder %s35, 0
      %p313 = por %p311, %p312
      %p314 = scmp.ne.s32.totalorder %s302, %s303
      %p315 = scmp.eq.s32.totalorder %s36, 1
      %p316 = por %p314, %p315
      %p318 = scmp.ne.s32.totalorder %s303, %s317
      %p319 = scmp.eq.s32.totalorder %s36, 0
      %p320 = por %p318, %p319
      %s322 = sadd.s32 %s321, 1
      %p325 = scmp.eq.s32.totalorder %s30, 1
      %p326 = scmp.ne.s32.totalorder %s321, %s323
      %p327 = scmp.eq.s32.totalorder %s30, 0
      %p328 = por %p326, %p327
      %p329 = scmp.ne.s32.totalorder %s321, %s323
      %p330 = scmp.eq.s32.totalorder %s35, 1
      %p331 = por %p329, %p330
      %p332 = scmp.ne.s32.totalorder %s323, %s324
      %p333 = scmp.eq.s32.totalorder %s35, 0
      %p334 = por %p332, %p333
      %p335 = scmp.ne.s32.totalorder %s323, %s324
      %p336 = scmp.eq.s32.totalorder %s36, 1
      %p337 = por %p335, %p336
      %p339 = scmp.ne.s32.totalorder %s324, %s338
      %p340 = scmp.eq.s32.totalorder %s36, 0
      %p341 = por %p339, %p340
      %s343 = sadd.s32 %s342, 1
      %p346 = scmp.eq.s32.totalorder %s30, 1
      %p347 = scmp.ne.s32.totalorder %s342, %s344
      %p348 = scmp.eq.s32.totalorder %s30, 0
      %p349 = por %p347, %p348
      %p350 = scmp.ne.s32.totalorder %s342, %s344
      %p351 = scmp.eq.s32.totalorder %s35, 1
      %p352 = por %p350, %p351
      %p353 = scmp.ne.s32.totalorder %s344, %s345
      %p354 = scmp.eq.s32.totalorder %s35, 0
      %p355 = por %p353, %p354
      %p356 = scmp.ne.s32.totalorder %s344, %s345
      %p357 = scmp.eq.s32.totalorder %s36, 1
      %p358 = por %p356, %p357
      %p360 = scmp.ne.s32.totalorder %s345, %s359
      %p361 = scmp.eq.s32.totalorder %s36, 0
      %p362 = por %p360, %p361
      %s364 = sadd.s32 %s363, 1
      %p367 = scmp.eq.s32.totalorder %s30, 1
      %p368 = scmp.ne.s32.totalorder %s363, %s365
      %p369 = scmp.eq.s32.totalorder %s30, 0
      %p370 = por %p368, %p369
      %p371 = scmp.ne.s32.totalorder %s363, %s365
      %p372 = scmp.eq.s32.totalorder %s35, 1
      %p373 = por %p371, %p372
      %p374 = scmp.ne.s32.totalorder %s365, %s366
      %p375 = scmp.eq.s32.totalorder %s35, 0
      %p376 = por %p374, %p375
      %p377 = scmp.ne.s32.totalorder %s365, %s366
      %p378 = scmp.eq.s32.totalorder %s36, 1
      %p379 = por %p377, %p378
      %p381 = scmp.ne.s32.totalorder %s366, %s380
      %p382 = scmp.eq.s32.totalorder %s36, 0
      %p383 = por %p381, %p382
      %s385 = sadd.s32 %s384, 1
      %p388 = scmp.eq.s32.totalorder %s30, 1
      %p389 = scmp.ne.s32.totalorder %s384, %s386
      %p390 = scmp.eq.s32.totalorder %s30, 0
      %p391 = por %p389, %p390
      %p392 = scmp.ne.s32.totalorder %s384, %s386
      %p393 = scmp.eq.s32.totalorder %s35, 1
      %p394 = por %p392, %p393
      %p395 = scmp.ne.s32.totalorder %s386, %s387
      %p396 = scmp.eq.s32.totalorder %s35, 0
      %p397 = por %p395, %p396
      %p398 = scmp.ne.s32.totalorder %s386, %s387
      %p399 = scmp.eq.s32.totalorder %s36, 1
      %p400 = por %p398, %p399
      %p402 = scmp.ne.s32.totalorder %s387, %s401
      %p403 = scmp.eq.s32.totalorder %s36, 0
      %p404 = por %p402, %p403
      %s406 = sadd.s32 %s405, 1
      %p409 = scmp.eq.s32.totalorder %s30, 1
      %p410 = scmp.ne.s32.totalorder %s405, %s407
      %p411 = scmp.eq.s32.totalorder %s30, 0
      %p412 = por %p410, %p411
      %p413 = scmp.ne.s32.totalorder %s405, %s407
      %p414 = scmp.eq.s32.totalorder %s35, 1
      %p415 = por %p413, %p414
      %p416 = scmp.ne.s32.totalorder %s407, %s408
      %p417 = scmp.eq.s32.totalorder %s35, 0
      %p418 = por %p416, %p417
      %p419 = scmp.ne.s32.totalorder %s407, %s408
      %p420 = scmp.eq.s32.totalorder %s36, 1
      %p421 = por %p419, %p420
      %p423 = scmp.ne.s32.totalorder %s408, %s422
      %p424 = scmp.eq.s32.totalorder %s36, 0
      %p425 = por %p423, %p424
      %s427 = sadd.s32 %s426, 1
      %p430 = scmp.eq.s32.totalorder %s30, 1
      %p431 = scmp.ne.s32.totalorder %s426, %s428
      %p432 = scmp.eq.s32.totalorder %s30, 0
      %p433 = por %p431, %p432
      %p434 = scmp.ne.s32.totalorder %s426, %s428
      %p435 = scmp.eq.s32.totalorder %s35, 1
      %p436 = por %p434, %p435
      %p437 = scmp.ne.s32.totalorder %s428, %s429
      %p438 = scmp.eq.s32.totalorder %s35, 0
      %p439 = por %p437, %p438
      %p440 = scmp.ne.s32.totalorder %s428, %s429
      %p441 = scmp.eq.s32.totalorder %s36, 1
      %p442 = por %p440, %p441
      %p444 = scmp.ne.s32.totalorder %s429, %s443
      %p445 = scmp.eq.s32.totalorder %s36, 0
      %p446 = por %p444, %p445
      %s448 = sadd.s32 %s447, 1
      %p451 = scmp.eq.s32.totalorder %s30, 1
      %p452 = scmp.ne.s32.totalorder %s447, %s449
      %p453 = scmp.eq.s32.totalorder %s30, 0
      %p454 = por %p452, %p453
      %p455 = scmp.ne.s32.totalorder %s447, %s449
      %p456 = scmp.eq.s32.totalorder %s35, 1
      %p457 = por %p455, %p456
      %p458 = scmp.ne.s32.totalorder %s449, %s450
      %p459 = scmp.eq.s32.totalorder %s35, 0
      %p460 = por %p458, %p459
      %p461 = scmp.ne.s32.totalorder %s449, %s450
      %p462 = scmp.eq.s32.totalorder %s36, 1
      %p463 = por %p461, %p462
      %p465 = scmp.ne.s32.totalorder %s450, %s464
      %p466 = scmp.eq.s32.totalorder %s36, 0
      %p467 = por %p465, %p466
      %s469 = sadd.s32 %s468, 1
      %p472 = scmp.eq.s32.totalorder %s30, 1
      %p473 = scmp.ne.s32.totalorder %s468, %s470
      %p474 = scmp.eq.s32.totalorder %s30, 0
      %p475 = por %p473, %p474
      %p476 = scmp.ne.s32.totalorder %s468, %s470
      %p477 = scmp.eq.s32.totalorder %s35, 1
      %p478 = por %p476, %p477
      %p479 = scmp.ne.s32.totalorder %s470, %s471
      %p480 = scmp.eq.s32.totalorder %s35, 0
      %p481 = por %p479, %p480
      %p482 = scmp.ne.s32.totalorder %s470, %s471
      %p483 = scmp.eq.s32.totalorder %s36, 1
      %p484 = por %p482, %p483
      %p486 = scmp.ne.s32.totalorder %s471, %s485
      %p487 = scmp.eq.s32.totalorder %s36, 0
      %p488 = por %p486, %p487
      %s489 = ssub.s32 %s30, %s37
      %p490 = scmp.eq.s32.totalorder %s489, 0
      %s492 = sadd.s32 %s491, 1
      %s493 = scalar_select %p490, %s491, %s492
      %p496 = pneg %p490
      %p497 = scmp.eq.s32.totalorder %s30, 1
      %p498 = por %p496, %p497
      %p499 = scmp.ne.s32.totalorder %s491, %s494
      %p500 = scmp.eq.s32.totalorder %s30, 0
      %p501 = por %p499, %p500
      %p502 = scmp.ne.s32.totalorder %s491, %s494
      %p503 = scmp.eq.s32.totalorder %s35, 1
      %p504 = por %p502, %p503
      %p505 = scmp.ne.s32.totalorder %s494, %s495
      %p506 = scmp.eq.s32.totalorder %s35, 0
      %p507 = por %p505, %p506
      %p508 = scmp.ne.s32.totalorder %s494, %s495
      %p509 = scmp.eq.s32.totalorder %s36, 1
      %p510 = por %p508, %p509
      %p512 = scmp.ne.s32.totalorder %s495, %s511
      %p513 = scmp.eq.s32.totalorder %s36, 0
      %p514 = por %p512, %p513
      %p515 = scmp.le.s32.totalorder 1, %s30
      %p516 = scmp.lt.s32.totalorder %s30, 3
      %p517 = pnand %p515, %p516
      %p518 = pneg %p517
      // Predicated region
      $region9: #{ecgformer_forward.1} parent=5 // pred_check
        _
      $region10: #{ecgformer_forward.1} parent=5 // pred_check_branch
        %520 = sbr.rel (%p517) target = $region12
      $region11: #{ecgformer_forward.1} parent=5 // pred_region
        %s521 = ssub.s32 %s30, 1
        // Predicated region
        $region13: #{ecgformer_forward.1} parent=11 // pred_check
          %p522 = pneg %p103
        $region14: #{ecgformer_forward.1} parent=11 // pred_check_branch
          %524 = sbr.rel (%p522) target = $region16
        $region15: #{ecgformer_forward.1} parent=11 // pred_region
          _
        $region16: #{ecgformer_forward.1} parent=11 // pred_fallthru
          _
        // Predicated region
        $region17: #{ecgformer_forward.1} parent=11 // pred_check
          %p525 = pneg %p124
        $region18: #{ecgformer_forward.1} parent=11 // pred_check_branch
          %527 = sbr.rel (%p525) target = $region20
        $region19: #{ecgformer_forward.1} parent=11 // pred_region
          _
        $region20: #{ecgformer_forward.1} parent=11 // pred_fallthru
          _
        // Predicated region
        $region21: #{ecgformer_forward.1} parent=11 // pred_check
          %p528 = pneg %p145
        $region22: #{ecgformer_forward.1} parent=11 // pred_check_branch
          %530 = sbr.rel (%p528) target = $region24
        $region23: #{ecgformer_forward.1} parent=11 // pred_region
          _
        $region24: #{ecgformer_forward.1} parent=11 // pred_fallthru
          _
        // Predicated region
        $region25: #{ecgformer_forward.1} parent=11 // pred_check
          %p531 = pneg %p166
        $region26: #{ecgformer_forward.1} parent=11 // pred_check_branch
          %533 = sbr.rel (%p531) target = $region28
        $region27: #{ecgformer_forward.1} parent=11 // pred_region
          _
        $region28: #{ecgformer_forward.1} parent=11 // pred_fallthru
          _
        // Predicated region
        $region29: #{ecgformer_forward.1} parent=11 // pred_check
          %p534 = pneg %p187
        $region30: #{ecgformer_forward.1} parent=11 // pred_check_branch
          %536 = sbr.rel (%p534) target = $region32
        $region31: #{ecgformer_forward.1} parent=11 // pred_region
          _
        $region32: #{ecgformer_forward.1} parent=11 // pred_fallthru
          _
        // Predicated region
        $region33: #{ecgformer_forward.1} parent=11 // pred_check
          %p537 = pneg %p208
        $region34: #{ecgformer_forward.1} parent=11 // pred_check_branch
          %539 = sbr.rel (%p537) target = $region36
        $region35: #{ecgformer_forward.1} parent=11 // pred_region
          _
        $region36: #{ecgformer_forward.1} parent=11 // pred_fallthru
          _
        // Predicated region
        $region37: #{ecgformer_forward.1} parent=11 // pred_check
          %p540 = pneg %p229
        $region38: #{ecgformer_forward.1} parent=11 // pred_check_branch
          %542 = sbr.rel (%p540) target = $region40
        $region39: #{ecgformer_forward.1} parent=11 // pred_region
          _
        $region40: #{ecgformer_forward.1} parent=11 // pred_fallthru
          _
        // Predicated region
        $region41: #{ecgformer_forward.1} parent=11 // pred_check
          %p543 = pneg %p250
        $region42: #{ecgformer_forward.1} parent=11 // pred_check_branch
          %545 = sbr.rel (%p543) target = $region44
        $region43: #{ecgformer_forward.1} parent=11 // pred_region
          _
        $region44: #{ecgformer_forward.1} parent=11 // pred_fallthru
          _
        // Predicated region
        $region45: #{ecgformer_forward.1} parent=11 // pred_check
          %p546 = pneg %p271
        $region46: #{ecgformer_forward.1} parent=11 // pred_check_branch
          %548 = sbr.rel (%p546) target = $region48
        $region47: #{ecgformer_forward.1} parent=11 // pred_region
          _
        $region48: #{ecgformer_forward.1} parent=11 // pred_fallthru
          _
        // Predicated region
        $region49: #{ecgformer_forward.1} parent=11 // pred_check
          %p549 = pneg %p292
        $region50: #{ecgformer_forward.1} parent=11 // pred_check_branch
          %551 = sbr.rel (%p549) target = $region52
        $region51: #{ecgformer_forward.1} parent=11 // pred_region
          _
        $region52: #{ecgformer_forward.1} parent=11 // pred_fallthru
          _
        // Predicated region
        $region53: #{ecgformer_forward.1} parent=11 // pred_check
          %p552 = pneg %p313
        $region54: #{ecgformer_forward.1} parent=11 // pred_check_branch
          %554 = sbr.rel (%p552) target = $region56
        $region55: #{ecgformer_forward.1} parent=11 // pred_region
          _
        $region56: #{ecgformer_forward.1} parent=11 // pred_fallthru
          _
        // Predicated region
        $region57: #{ecgformer_forward.1} parent=11 // pred_check
          %p555 = pneg %p334
        $region58: #{ecgformer_forward.1} parent=11 // pred_check_branch
          %557 = sbr.rel (%p555) target = $region60
        $region59: #{ecgformer_forward.1} parent=11 // pred_region
          _
        $region60: #{ecgformer_forward.1} parent=11 // pred_fallthru
          _
        // Predicated region
        $region61: #{ecgformer_forward.1} parent=11 // pred_check
          %p558 = pneg %p355
        $region62: #{ecgformer_forward.1} parent=11 // pred_check_branch
          %560 = sbr.rel (%p558) target = $region64
        $region63: #{ecgformer_forward.1} parent=11 // pred_region
          _
        $region64: #{ecgformer_forward.1} parent=11 // pred_fallthru
          _
        // Predicated region
        $region65: #{ecgformer_forward.1} parent=11 // pred_check
          %p561 = pneg %p376
        $region66: #{ecgformer_forward.1} parent=11 // pred_check_branch
          %563 = sbr.rel (%p561) target = $region68
        $region67: #{ecgformer_forward.1} parent=11 // pred_region
          _
        $region68: #{ecgformer_forward.1} parent=11 // pred_fallthru
          _
        // Predicated region
        $region69: #{ecgformer_forward.1} parent=11 // pred_check
          %p564 = pneg %p397
        $region70: #{ecgformer_forward.1} parent=11 // pred_check_branch
          %566 = sbr.rel (%p564) target = $region72
        $region71: #{ecgformer_forward.1} parent=11 // pred_region
          _
        $region72: #{ecgformer_forward.1} parent=11 // pred_fallthru
          _
        // Predicated region
        $region73: #{ecgformer_forward.1} parent=11 // pred_check
          %p567 = pneg %p418
        $region74: #{ecgformer_forward.1} parent=11 // pred_check_branch
          %569 = sbr.rel (%p567) target = $region76
        $region75: #{ecgformer_forward.1} parent=11 // pred_region
          _
        $region76: #{ecgformer_forward.1} parent=11 // pred_fallthru
          _
        // Predicated region
        $region77: #{ecgformer_forward.1} parent=11 // pred_check
          %p570 = pneg %p439
        $region78: #{ecgformer_forward.1} parent=11 // pred_check_branch
          %572 = sbr.rel (%p570) target = $region80
        $region79: #{ecgformer_forward.1} parent=11 // pred_region
          _
        $region80: #{ecgformer_forward.1} parent=11 // pred_fallthru
          _
        // Predicated region
        $region81: #{ecgformer_forward.1} parent=11 // pred_check
          %p573 = pneg %p460
        $region82: #{ecgformer_forward.1} parent=11 // pred_check_branch
          %575 = sbr.rel (%p573) target = $region84
        $region83: #{ecgformer_forward.1} parent=11 // pred_region
          _
        $region84: #{ecgformer_forward.1} parent=11 // pred_fallthru
          _
        // Predicated region
        $region85: #{ecgformer_forward.1} parent=11 // pred_check
          %p576 = pneg %p481
        $region86: #{ecgformer_forward.1} parent=11 // pred_check_branch
          %578 = sbr.rel (%p576) target = $region88
        $region87: #{ecgformer_forward.1} parent=11 // pred_region
          _
        $region88: #{ecgformer_forward.1} parent=11 // pred_fallthru
          _
      $region12: #{ecgformer_forward.1} parent=5 // pred_fallthru
        _
      %p579 = scmp.lt.s32.totalorder %s30, 2
      // Predicated region
      $region89: #{ecgformer_forward.1} parent=5 // pred_check
        %p580 = pneg %p579
      $region90: #{ecgformer_forward.1} parent=5 // pred_check_branch
        %582 = sbr.rel (%p580) target = $region92
      $region91: #{ecgformer_forward.1} parent=5 // pred_region
        // Predicated region
        $region93: #{ecgformer_forward.1} parent=91 // pred_check
          %p583 = pneg %p50
        $region94: #{ecgformer_forward.1} parent=91 // pred_check_branch
          %585 = sbr.rel (%p583) target = $region96
        $region95: #{ecgformer_forward.1} parent=91 // pred_region
          %p586 = scmp.lt.s32.totalorder %s30, 1
          %s587 = scalar_select %p586, %s30, 1
          %s588 = smul.addr %s587, 8
          %s589 = scalar_lea.vmem %s0, %s588
        $region96: #{ecgformer_forward.1} parent=91 // pred_fallthru
          _
        // Predicated region
        $region97: #{ecgformer_forward.1} parent=91 // pred_check
          %p590 = pneg %p76
        $region98: #{ecgformer_forward.1} parent=91 // pred_check_branch
          %592 = sbr.rel (%p590) target = $region100
        $region99: #{ecgformer_forward.1} parent=91 // pred_region
          %p593 = scmp.lt.s32.totalorder %s30, 1
          %s594 = scalar_select %p593, %s30, 1
          %s595 = smul.addr %s594, 2
          %s596 = smul.addr %s595, 8
          %s597 = scalar_lea.vmem %s1, %s596
        $region100: #{ecgformer_forward.1} parent=91 // pred_fallthru
          _
      $region92: #{ecgformer_forward.1} parent=5 // pred_fallthru
        _
      %p598 = scmp.le.s32.totalorder 1, %s30
      %p599 = scmp.lt.s32.totalorder %s30, 3
      %p600 = pnand %p598, %p599
      %p601 = pneg %p600
      // Predicated region
      $region101: #{ecgformer_forward.1} parent=5 // pred_check
        _
      $region102: #{ecgformer_forward.1} parent=5 // pred_check_branch
        %603 = sbr.rel (%p600) target = $region104
      $region103: #{ecgformer_forward.1} parent=5 // pred_region
        %s604 = ssub.s32 %s30, 1
        %p605 = scmp.lt.s32.totalorder %s35, 1
        %s606 = scalar_select %p605, %s35, 1
        %s607 = smul.addr %s606, 8
        %s608 = scalar_lea.vmem %s0, %s607
        %p609 = pneg %p56
        %p610 = pneg %p53
        %p611 = scmp.lt.s32.totalorder %s35, 1
        %s612 = scalar_select %p611, %s35, 1
        %s613 = smul.addr %s612, 2
        %s614 = smul.addr %s613, 8
        %s615 = scalar_lea.vmem %s1, %s614
        %p616 = pneg %p82
        %p617 = pneg %p79
        %p618 = pneg %p103
        %p619 = pneg %p100
        %p620 = pneg %p124
        %p621 = pneg %p121
        %p622 = pneg %p145
        %p623 = pneg %p142
        %p624 = pneg %p166
        %p625 = pneg %p163
        %p626 = pneg %p187
        %p627 = pneg %p184
        %p628 = pneg %p208
        %p629 = pneg %p205
        %p630 = pneg %p229
        %p631 = pneg %p226
        %p632 = pneg %p250
        %p633 = pneg %p247
        %p634 = pneg %p271
        %p635 = pneg %p268
        %p636 = pneg %p292
        %p637 = pneg %p289
        %p638 = pneg %p313
        %p639 = pneg %p310
        %p640 = pneg %p334
        %p641 = pneg %p331
        %p642 = pneg %p355
        %p643 = pneg %p352
        %p644 = pneg %p376
        %p645 = pneg %p373
        %p646 = pneg %p397
        %p647 = pneg %p394
        %p648 = pneg %p418
        %p649 = pneg %p415
        %p650 = pneg %p439
        %p651 = pneg %p436
        %p652 = pneg %p460
        %p653 = pneg %p457
        %p654 = pneg %p481
        %p655 = pneg %p478
        %p656 = pneg %p507
        %p657 = pneg %p504
        %s658 = sand.u32 %s494, 1
        %s659 = scalar_lea.sflag [#allocation5], %s658
        %s660 = sand.u32 %s494, 1
        %s661 = smul.addr %s660, 8
        %s662 = scalar_lea.vmem [#allocation4], %s661
        %p663 = scmp.lt.s32.totalorder %s35, 1
        %s664 = scalar_select %p663, %s35, 1
        %s665 = smul.addr %s664, 8
        %s666 = scalar_lea.vmem %s0, %s665
        %p667 = scmp.lt.s32.totalorder %s35, 1
        %s668 = scalar_select %p667, %s35, 1
        %s669 = smul.addr %s668, 2
        %s670 = smul.addr %s669, 8
        %s671 = scalar_lea.vmem %s1, %s670
        %v672 = vld [vmem:[%s2] sm:$0xff]
        %v673 = vld [vmem:[%s2 + $0x8] sm:$0xff]
        %v674 = vld [vmem:[%s3] sm:$0xff]
        %v675 = vld [vmem:[%s3 + $0x8] sm:$0xff]
        %v676 = vld [vmem:[%s4] sm:$0xff]
        %v677 = vld [vmem:[%s4 + $0x8] sm:$0xff]
        %v678 = vld [vmem:[%s5] sm:$0xff]
        %v679 = vld [vmem:[%s5 + $0x8] sm:$0xff]
        %v680 = vld [vmem:[%s6] sm:$0xff]
        %v681 = vld [vmem:[%s6 + $0x8] sm:$0xff]
        %v682 = vld [vmem:[%s7] sm:$0xff]
        %v683 = vld [vmem:[%s7 + $0x8] sm:$0xff]
        %v684 = vld [vmem:[%s8] sm:$0xff]
        %v685 = vld [vmem:[%s8 + $0x8] sm:$0xff]
        %v686 = vld [vmem:[%s8 + $0x10] sm:$0xff]
        %v687 = vld [vmem:[%s9] sm:$0xff]
        %v688 = vld [vmem:[%s9 + $0x8] sm:$0xff]
        %v689 = vld [vmem:[%s9 + $0x10] sm:$0xff]
        %v690 = vld [vmem:[%s10] sm:$0xff]
        %v691 = vld [vmem:[%s10 + $0x8] sm:$0xff]
        %v692 = vld [vmem:[%s10 + $0x10] sm:$0xff]
        %693 = vst [vmem:[#allocation2] sm:$0xff] 0.0
        %694 = vst [vmem:[#allocation2 + $0x10] sm:$0xff] 0.0
        %695 = vst [vmem:[#allocation2 + $0x20] sm:$0xff] 0.0
        %696 = vst [vmem:[#allocation3] sm:$0xff] 0.0
        %697 = vst [vmem:[#allocation3 + $0x10] sm:$0xff] 0.0
        %698 = vst [vmem:[#allocation3 + $0x20] sm:$0xff] 0.0
        %v699 = vld [vmem:[%s671] sm:$0xff]
        %v700 = vld [vmem:[%s671 + $0x8] sm:$0xf]
        %702 = vset.pattern.permute.xlu0 0
        %703 = vperm.xlu0 %702, %v674
        %v704 = vpop.permute.xlu0 %703
        %707 = vset.pattern.permute.xlu0 0
        %708 = vperm.xlu0 %707, %v675
        %v709 = vpop.permute.xlu0 %708
        %vm711 = vcmask 97280
        %v713 = vsel %vm711, %v672, 0
        %v716 = vsel %vm711, %v673, 0
        %vm718 = vcmask 1043456
        %v720 = vsel %vm718, %v700, 0
        %722 = vmatprep.subr.mxu0 0.0
        %723 = vmatpush1.msra.mxu0 %v699
        %724 = vmatprep.subr.mxu0 0.0
        %725 = vmatpush1.msra.mxu0 %v720
        %726 = vmatprep.subr.mxu0 0.0
        %727 = vmatpush1.msra.mxu0 0.0
        %728 = vmatprep.subr.mxu0 0.0
        %729 = vmatpush1.msra.mxu0 0.0
        %730 = vmatprep.subr.mxu0 0.0
        %731 = vmatpush1.msra.mxu0 0.0
        %732 = vmatprep.subr.mxu0 0.0
        %733 = vmatpush1.msra.mxu0 0.0
        %734 = vmatprep.subr.mxu0 0.0
        %735 = vmatpush1.msra.mxu0 0.0
        %736 = vmatprep.subr.mxu0 0.0
        %737 = vmatpush1.msra.mxu0 0.0
        %738 = vmatprep.subr.mxu0 0.0
        %739 = vmatpush1.msra.mxu0 0.0
        %740 = vmatprep.subr.mxu0 0.0
        %741 = vmatpush1.msra.mxu0 0.0
        %742 = vmatprep.subr.mxu0 0.0
        %743 = vmatpush1.msra.mxu0 0.0
        %744 = vmatprep.subr.mxu0 0.0
        %745 = vmatpush1.msra.mxu0 0.0
        %746 = vmatprep.subr.mxu0 0.0
        %747 = vmatpush1.msra.mxu0 0.0
        %748 = vmatprep.subr.mxu0 0.0
        %749 = vmatpush1.msra.mxu0 0.0
        %750 = vmatprep.subr.mxu0 0.0
        %751 = vmatpush1.msra.mxu0 0.0
        %752 = vmatprep.subr.mxu0 0.0
        %753 = vmatpush1.msra.mxu0 0.0
        %754 = vmatprep.subr.mxu0 0.0
        %755 = vmatpush1.msra.mxu0 0.0
        %756 = vmatprep.subr.mxu0 0.0
        %757 = vmatpush1.msra.mxu0 0.0
        %758 = vmatprep.subr.mxu0 0.0
        %759 = vmatpush1.msra.mxu0 0.0
        %760 = vmatprep.subr.mxu0 0.0
        %761 = vmatpush1.msra.mxu0 0.0
        %762 = vmatprep.subr.mxu0 0.0
        %763 = vmatpush1.msra.mxu0 0.0
        %764 = vmatprep.subr.mxu0 0.0
        %765 = vmatpush1.msra.mxu0 0.0
        %766 = vmatprep.subr.mxu0 0.0
        %767 = vmatpush1.msra.mxu0 0.0
        %768 = vmatprep.subr.mxu0 0.0
        %769 = vmatpush1.msra.mxu0 0.0
        %770 = vmatprep.subr.mxu0 0.0
        %771 = vmatpush1.msra.mxu0 0.0
        %772 = vmatprep.subr.mxu0 0.0
        %773 = vmatpush1.msra.mxu0 0.0
        %774 = vmatprep.subr.mxu0 0.0
        %775 = vmatpush1.msra.mxu0 0.0
        %776 = vmatprep.subr.mxu0 0.0
        %777 = vmatpush1.msra.mxu0 0.0
        %778 = vmatprep.subr.mxu0 0.0
        %779 = vmatpush1.msra.mxu0 0.0
        %780 = vmatprep.subr.mxu0 0.0
        %781 = vmatpush1.msra.mxu0 0.0
        %782 = vmatprep.subr.mxu0 0.0
        %783 = vmatpush1.msra.mxu0 0.0
        %784 = vmatprep.subr.mxu0 0.0
        %785 = vmatpush1.msra.mxu0 0.0
        %786 = vmatprep.mubr.f32.mxu0 0.0
        %787 = vmatmul.mubr.f32.gmra.mrb[0].mxu0 %v713
        %v788 = vpop.f32.mrb[0].mxu0
        %v789 = vadd.f32 %v704, %v788
        %v790 = vpop.f32.mrb[0].mxu0
        %791 = vmatprep.mubr.f32.mxu0 0.0
        %792 = vmatmul.mubr.f32.gmra.mrb[0].mxu0 %v716
        %v793 = vpop.f32.mrb[0].mxu0
        %v794 = vadd.f32 %v709, %v793
        %v795 = vpop.f32.mrb[0].mxu0
        %796 = vdwg.mxu0
        %v797 = vmax.f32 %v789, 0.0
        %v798 = vmax.f32 %v794, 0.0
        %800 = vset.pattern.permute.xlu0 0
        %801 = vperm.xlu0 %800, %v678
        %v802 = vpop.permute.xlu0 %801
        %805 = vset.pattern.permute.xlu0 0
        %806 = vperm.xlu0 %805, %v679
        %v807 = vpop.permute.xlu0 %806
        %vm809 = vcmask 130048
        %v811 = vsel %vm809, %v676, 0
        %v814 = vsel %vm809, %v677, 0
        %816 = vmatprep.subr.mxu0 0.0
        %817 = vmatpush1.msra.mxu0 %v797
        %818 = vmatprep.subr.mxu0 0.0
        %819 = vmatpush1.msra.mxu0 %v798
        %820 = vmatprep.subr.mxu0 0.0
        %821 = vmatpush1.msra.mxu0 0.0
        %822 = vmatprep.subr.mxu0 0.0
        %823 = vmatpush1.msra.mxu0 0.0
        %824 = vmatprep.subr.mxu0 0.0
        %825 = vmatpush1.msra.mxu0 0.0
        %826 = vmatprep.subr.mxu0 0.0
        %827 = vmatpush1.msra.mxu0 0.0
        %828 = vmatprep.subr.mxu0 0.0
        %829 = vmatpush1.msra.mxu0 0.0
        %830 = vmatprep.subr.mxu0 0.0
        %831 = vmatpush1.msra.mxu0 0.0
        %832 = vmatprep.subr.mxu0 0.0
        %833 = vmatpush1.msra.mxu0 0.0
        %834 = vmatprep.subr.mxu0 0.0
        %835 = vmatpush1.msra.mxu0 0.0
        %836 = vmatprep.subr.mxu0 0.0
        %837 = vmatpush1.msra.mxu0 0.0
        %838 = vmatprep.subr.mxu0 0.0
        %839 = vmatpush1.msra.mxu0 0.0
        %840 = vmatprep.subr.mxu0 0.0
        %841 = vmatpush1.msra.mxu0 0.0
        %842 = vmatprep.subr.mxu0 0.0
        %843 = vmatpush1.msra.mxu0 0.0
        %844 = vmatprep.subr.mxu0 0.0
        %845 = vmatpush1.msra.mxu0 0.0
        %846 = vmatprep.subr.mxu0 0.0
        %847 = vmatpush1.msra.mxu0 0.0
        %848 = vmatprep.subr.mxu0 0.0
        %849 = vmatpush1.msra.mxu0 0.0
        %850 = vmatprep.subr.mxu0 0.0
        %851 = vmatpush1.msra.mxu0 0.0
        %852 = vmatprep.subr.mxu0 0.0
        %853 = vmatpush1.msra.mxu0 0.0
        %854 = vmatprep.subr.mxu0 0.0
        %855 = vmatpush1.msra.mxu0 0.0
        %856 = vmatprep.subr.mxu0 0.0
        %857 = vmatpush1.msra.mxu0 0.0
        %858 = vmatprep.subr.mxu0 0.0
        %859 = vmatpush1.msra.mxu0 0.0
        %860 = vmatprep.subr.mxu0 0.0
        %861 = vmatpush1.msra.mxu0 0.0
        %862 = vmatprep.subr.mxu0 0.0
        %863 = vmatpush1.msra.mxu0 0.0
        %864 = vmatprep.subr.mxu0 0.0
        %865 = vmatpush1.msra.mxu0 0.0
        %866 = vmatprep.subr.mxu0 0.0
        %867 = vmatpush1.msra.mxu0 0.0
        %868 = vmatprep.subr.mxu0 0.0
        %869 = vmatpush1.msra.mxu0 0.0
        %870 = vmatprep.subr.mxu0 0.0
        %871 = vmatpush1.msra.mxu0 0.0
        %872 = vmatprep.subr.mxu0 0.0
        %873 = vmatpush1.msra.mxu0 0.0
        %874 = vmatprep.subr.mxu0 0.0
        %875 = vmatpush1.msra.mxu0 0.0
        %876 = vmatprep.subr.mxu0 0.0
        %877 = vmatpush1.msra.mxu0 0.0
        %878 = vmatprep.subr.mxu0 0.0
        %879 = vmatpush1.msra.mxu0 0.0
        %880 = vmatprep.mubr.f32.mxu0 0.0
        %881 = vmatmul.mubr.f32.gmra.mrb[0].mxu0 %v811
        %v882 = vpop.f32.mrb[0].mxu0
        %v883 = vadd.f32 %v802, %v882
        %v884 = vpop.f32.mrb[0].mxu0
        %885 = vmatprep.mubr.f32.mxu0 0.0
        %886 = vmatmul.mubr.f32.gmra.mrb[0].mxu0 %v814
        %v887 = vpop.f32.mrb[0].mxu0
        %v888 = vadd.f32 %v807, %v887
        %v889 = vpop.f32.mrb[0].mxu0
        %890 = vdwg.mxu0
        %v891 = vmax.f32 %v883, 0.0
        %v892 = vmax.f32 %v888, 0.0
        %v893 = vld [vmem:[%s666] sm:$0xff]
        %895 = vset.pattern.permute.xlu0 0
        %896 = vperm.xlu0 %895, %v682
        %v897 = vpop.permute.xlu0 %896
        %900 = vset.pattern.permute.xlu0 0
        %901 = vperm.xlu0 %900, %v683
        %v902 = vpop.permute.xlu0 %901
        %vm904 = vcmask 64512
        %v906 = vsel %vm904, %v680, 0
        %v909 = vsel %vm904, %v681, 0
        %911 = vmatprep.subr.mxu0 0.0
        %912 = vmatpush1.msra.mxu0 %v893
        %913 = vmatprep.subr.mxu0 0.0
        %914 = vmatpush1.msra.mxu0 0.0
        %915 = vmatprep.subr.mxu0 0.0
        %916 = vmatpush1.msra.mxu0 0.0
        %917 = vmatprep.subr.mxu0 0.0
        %918 = vmatpush1.msra.mxu0 0.0
        %919 = vmatprep.subr.mxu0 0.0
        %920 = vmatpush1.msra.mxu0 0.0
        %921 = vmatprep.subr.mxu0 0.0
        %922 = vmatpush1.msra.mxu0 0.0
        %923 = vmatprep.subr.mxu0 0.0
        %924 = vmatpush1.msra.mxu0 0.0
        %925 = vmatprep.subr.mxu0 0.0
        %926 = vmatpush1.msra.mxu0 0.0
        %927 = vmatprep.subr.mxu0 0.0
        %928 = vmatpush1.msra.mxu0 0.0
        %929 = vmatprep.subr.mxu0 0.0
        %930 = vmatpush1.msra.mxu0 0.0
        %931 = vmatprep.subr.mxu0 0.0
        %932 = vmatpush1.msra.mxu0 0.0
        %933 = vmatprep.subr.mxu0 0.0
        %934 = vmatpush1.msra.mxu0 0.0
        %935 = vmatprep.subr.mxu0 0.0
        %936 = vmatpush1.msra.mxu0 0.0
        %937 = vmatprep.subr.mxu0 0.0
        %938 = vmatpush1.msra.mxu0 0.0
        %939 = vmatprep.subr.mxu0 0.0
        %940 = vmatpush1.msra.mxu0 0.0
        %941 = vmatprep.subr.mxu0 0.0
        %942 = vmatpush1.msra.mxu0 0.0
        %943 = vmatprep.subr.mxu0 0.0
        %944 = vmatpush1.msra.mxu0 0.0
        %945 = vmatprep.subr.mxu0 0.0
        %946 = vmatpush1.msra.mxu0 0.0
        %947 = vmatprep.subr.mxu0 0.0
        %948 = vmatpush1.msra.mxu0 0.0
        %949 = vmatprep.subr.mxu0 0.0
        %950 = vmatpush1.msra.mxu0 0.0
        %951 = vmatprep.subr.mxu0 0.0
        %952 = vmatpush1.msra.mxu0 0.0
        %953 = vmatprep.subr.mxu0 0.0
        %954 = vmatpush1.msra.mxu0 0.0
        %955 = vmatprep.subr.mxu0 0.0
        %956 = vmatpush1.msra.mxu0 0.0
        %957 = vmatprep.subr.mxu0 0.0
        %958 = vmatpush1.msra.mxu0 0.0
        %959 = vmatprep.subr.mxu0 0.0
        %960 = vmatpush1.msra.mxu0 0.0
        %961 = vmatprep.subr.mxu0 0.0
        %962 = vmatpush1.msra.mxu0 0.0
        %963 = vmatprep.subr.mxu0 0.0
        %964 = vmatpush1.msra.mxu0 0.0
        %965 = vmatprep.subr.mxu0 0.0
        %966 = vmatpush1.msra.mxu0 0.0
        %967 = vmatprep.subr.mxu0 0.0
        %968 = vmatpush1.msra.mxu0 0.0
        %969 = vmatprep.subr.mxu0 0.0
        %970 = vmatpush1.msra.mxu0 0.0
        %971 = vmatprep.subr.mxu0 0.0
        %972 = vmatpush1.msra.mxu0 0.0
        %973 = vmatprep.subr.mxu0 0.0
        %974 = vmatpush1.msra.mxu0 0.0
        %975 = vmatprep.mubr.f32.mxu0 0.0
        %976 = vmatmul.mubr.f32.gmra.mrb[0].mxu0 %v906
        %v977 = vpop.f32.mrb[0].mxu0
        %v978 = vadd.f32 %v897, %v977
        %v979 = vpop.f32.mrb[0].mxu0
        %980 = vmatprep.mubr.f32.mxu0 0.0
        %981 = vmatmul.mubr.f32.gmra.mrb[0].mxu0 %v909
        %v982 = vpop.f32.mrb[0].mxu0
        %v983 = vadd.f32 %v902, %v982
        %v984 = vpop.f32.mrb[0].mxu0
        %985 = vdwg.mxu0
        %v986 = vmax.f32 %v978, 0.0
        %v987 = vmax.f32 %v983, 0.0
        %v989 = vsel %vm809, %v687, 0
        %v992 = vsel %vm809, %v688, 0
        %v995 = vsel %vm809, %v689, 0
        %997 = vmatprep.subr.mxu0 0.0
        %998 = vmatpush1.msra.mxu0 %v891
        %999 = vmatprep.subr.mxu0 0.0
        %1000 = vmatpush1.msra.mxu0 %v892
        %1001 = vmatprep.subr.mxu0 0.0
        %1002 = vmatpush1.msra.mxu0 0.0
        %1003 = vmatprep.subr.mxu0 0.0
        %1004 = vmatpush1.msra.mxu0 0.0
        %1005 = vmatprep.subr.mxu0 0.0
        %1006 = vmatpush1.msra.mxu0 0.0
        %1007 = vmatprep.subr.mxu0 0.0
        %1008 = vmatpush1.msra.mxu0 0.0
        %1009 = vmatprep.subr.mxu0 0.0
        %1010 = vmatpush1.msra.mxu0 0.0
        %1011 = vmatprep.subr.mxu0 0.0
        %1012 = vmatpush1.msra.mxu0 0.0
        %1013 = vmatprep.subr.mxu0 0.0
        %1014 = vmatpush1.msra.mxu0 0.0
        %1015 = vmatprep.subr.mxu0 0.0
        %1016 = vmatpush1.msra.mxu0 0.0
        %1017 = vmatprep.subr.mxu0 0.0
        %1018 = vmatpush1.msra.mxu0 0.0
        %1019 = vmatprep.subr.mxu0 0.0
        %1020 = vmatpush1.msra.mxu0 0.0
        %1021 = vmatprep.subr.mxu0 0.0
        %1022 = vmatpush1.msra.mxu0 0.0
        %1023 = vmatprep.subr.mxu0 0.0
        %1024 = vmatpush1.msra.mxu0 0.0
        %1025 = vmatprep.subr.mxu0 0.0
        %1026 = vmatpush1.msra.mxu0 0.0
        %1027 = vmatprep.subr.mxu0 0.0
        %1028 = vmatpush1.msra.mxu0 0.0
        %1029 = vmatprep.subr.mxu0 0.0
        %1030 = vmatpush1.msra.mxu0 0.0
        %1031 = vmatprep.subr.mxu0 0.0
        %1032 = vmatpush1.msra.mxu0 0.0
        %1033 = vmatprep.subr.mxu0 0.0
        %1034 = vmatpush1.msra.mxu0 0.0
        %1035 = vmatprep.subr.mxu0 0.0
        %1036 = vmatpush1.msra.mxu0 0.0
        %1037 = vmatprep.subr.mxu0 0.0
        %1038 = vmatpush1.msra.mxu0 0.0
        %1039 = vmatprep.subr.mxu0 0.0
        %1040 = vmatpush1.msra.mxu0 0.0
        %1041 = vmatprep.subr.mxu0 0.0
        %1042 = vmatpush1.msra.mxu0 0.0
        %1043 = vmatprep.subr.mxu0 0.0
        %1044 = vmatpush1.msra.mxu0 0.0
        %1045 = vmatprep.subr.mxu0 0.0
        %1046 = vmatpush1.msra.mxu0 0.0
        %1047 = vmatprep.subr.mxu0 0.0
        %1048 = vmatpush1.msra.mxu0 0.0
        %1049 = vmatprep.subr.mxu0 0.0
        %1050 = vmatpush1.msra.mxu0 0.0
        %1051 = vmatprep.subr.mxu0 0.0
        %1052 = vmatpush1.msra.mxu0 0.0
        %1053 = vmatprep.subr.mxu0 0.0
        %1054 = vmatpush1.msra.mxu0 0.0
        %1055 = vmatprep.subr.mxu0 0.0
        %1056 = vmatpush1.msra.mxu0 0.0
        %1057 = vmatprep.subr.mxu0 0.0
        %1058 = vmatpush1.msra.mxu0 0.0
        %1059 = vmatprep.subr.mxu0 0.0
        %1060 = vmatpush1.msra.mxu0 0.0
        %1061 = vmatprep.mubr.f32.mxu0 0.0
        %1062 = vmatmul.mubr.f32.gmra.mrb[0].mxu0 %v989
        %v1063 = vpop.f32.mrb[0].mxu0
        %v1064 = vadd.f32 0.0, %v1063
        %v1065 = vpop.f32.mrb[0].mxu0
        %1066 = vmatprep.mubr.f32.mxu0 0.0
        %1067 = vmatmul.mubr.f32.gmra.mrb[0].mxu0 %v992
        %v1068 = vpop.f32.mrb[0].mxu0
        %v1069 = vadd.f32 0.0, %v1068
        %v1070 = vpop.f32.mrb[0].mxu0
        %1071 = vmatprep.mubr.f32.mxu0 0.0
        %1072 = vmatmul.mubr.f32.gmra.mrb[0].mxu0 %v995
        %v1073 = vpop.f32.mrb[0].mxu0
        %v1074 = vadd.f32 0.0, %v1073
        %v1075 = vpop.f32.mrb[0].mxu0
        %1076 = vdwg.mxu0
        %v1078 = vsel %vm809, %v684, 0
        %v1081 = vsel %vm809, %v685, 0
        %v1084 = vsel %vm809, %v686, 0
        %1086 = vmatprep.subr.mxu0 0.0
        %1087 = vmatpush1.msra.mxu0 %v986
        %1088 = vmatprep.subr.mxu0 0.0
        %1089 = vmatpush1.msra.mxu0 %v987
        %1090 = vmatprep.subr.mxu0 0.0
        %1091 = vmatpush1.msra.mxu0 0.0
        %1092 = vmatprep.subr.mxu0 0.0
        %1093 = vmatpush1.msra.mxu0 0.0
        %1094 = vmatprep.subr.mxu0 0.0
        %1095 = vmatpush1.msra.mxu0 0.0
        %1096 = vmatprep.subr.mxu0 0.0
        %1097 = vmatpush1.msra.mxu0 0.0
        %1098 = vmatprep.subr.mxu0 0.0
        %1099 = vmatpush1.msra.mxu0 0.0
        %1100 = vmatprep.subr.mxu0 0.0
        %1101 = vmatpush1.msra.mxu0 0.0
        %1102 = vmatprep.subr.mxu0 0.0
        %1103 = vmatpush1.msra.mxu0 0.0
        %1104 = vmatprep.subr.mxu0 0.0
        %1105 = vmatpush1.msra.mxu0 0.0
        %1106 = vmatprep.subr.mxu0 0.0
        %1107 = vmatpush1.msra.mxu0 0.0
        %1108 = vmatprep.subr.mxu0 0.0
        %1109 = vmatpush1.msra.mxu0 0.0
        %1110 = vmatprep.subr.mxu0 0.0
        %1111 = vmatpush1.msra.mxu0 0.0
        %1112 = vmatprep.subr.mxu0 0.0
        %1113 = vmatpush1.msra.mxu0 0.0
        %1114 = vmatprep.subr.mxu0 0.0
        %1115 = vmatpush1.msra.mxu0 0.0
        %1116 = vmatprep.subr.mxu0 0.0
        %1117 = vmatpush1.msra.mxu0 0.0
        %1118 = vmatprep.subr.mxu0 0.0
        %1119 = vmatpush1.msra.mxu0 0.0
        %1120 = vmatprep.subr.mxu0 0.0
        %1121 = vmatpush1.msra.mxu0 0.0
        %1122 = vmatprep.subr.mxu0 0.0
        %1123 = vmatpush1.msra.mxu0 0.0
        %1124 = vmatprep.subr.mxu0 0.0
        %1125 = vmatpush1.msra.mxu0 0.0
        %1126 = vmatprep.subr.mxu0 0.0
        %1127 = vmatpush1.msra.mxu0 0.0
        %1128 = vmatprep.subr.mxu0 0.0
        %1129 = vmatpush1.msra.mxu0 0.0
        %1130 = vmatprep.subr.mxu0 0.0
        %1131 = vmatpush1.msra.mxu0 0.0
        %1132 = vmatprep.subr.mxu0 0.0
        %1133 = vmatpush1.msra.mxu0 0.0
        %1134 = vmatprep.subr.mxu0 0.0
        %1135 = vmatpush1.msra.mxu0 0.0
        %1136 = vmatprep.subr.mxu0 0.0
        %1137 = vmatpush1.msra.mxu0 0.0
        %1138 = vmatprep.subr.mxu0 0.0
        %1139 = vmatpush1.msra.mxu0 0.0
        %1140 = vmatprep.subr.mxu0 0.0
        %1141 = vmatpush1.msra.mxu0 0.0
        %1142 = vmatprep.subr.mxu0 0.0
        %1143 = vmatpush1.msra.mxu0 0.0
        %1144 = vmatprep.subr.mxu0 0.0
        %1145 = vmatpush1.msra.mxu0 0.0
        %1146 = vmatprep.subr.mxu0 0.0
        %1147 = vmatpush1.msra.mxu0 0.0
        %1148 = vmatprep.subr.mxu0 0.0
        %1149 = vmatpush1.msra.mxu0 0.0
        %1150 = vmatprep.mubr.f32.mxu0 0.0
        %1151 = vmatmul.mubr.f32.gmra.mrb[0].mxu0 %v1078
        %v1152 = vpop.f32.mrb[0].mxu0
        %v1153 = vadd.f32 %v1064, %v1152
        %v1154 = vpop.f32.mrb[0].mxu0
        %1155 = vmatprep.mubr.f32.mxu0 0.0
        %1156 = vmatmul.mubr.f32.gmra.mrb[0].mxu0 %v1081
        %v1157 = vpop.f32.mrb[0].mxu0
        %v1158 = vadd.f32 %v1069, %v1157
        %v1159 = vpop.f32.mrb[0].mxu0
        %1160 = vmatprep.mubr.f32.mxu0 0.0
        %1161 = vmatmul.mubr.f32.gmra.mrb[0].mxu0 %v1084
        %v1162 = vpop.f32.mrb[0].mxu0
        %v1163 = vadd.f32 %v1074, %v1162
        %v1164 = vpop.f32.mrb[0].mxu0
        %1165 = vdwg.mxu0
        %1167 = vset.pattern.permute.xlu0 0
        %1168 = vperm.xlu0 %1167, %v690
        %v1169 = vpop.permute.xlu0 %1168
        %1172 = vset.pattern.permute.xlu0 0
        %1173 = vperm.xlu0 %1172, %v691
        %v1174 = vpop.permute.xlu0 %1173
        %1177 = vset.pattern.permute.xlu0 0
        %1178 = vperm.xlu0 %1177, %v692
        %v1179 = vpop.permute.xlu0 %1178
        %v1181 = vadd.f32 %v1153, %v1169
        %v1182 = vadd.f32 %v1158, %v1174
        %v1183 = vadd.f32 %v1163, %v1179
        %v1184 = vmax.f32 %v1181, 0.0
        %v1185 = vmax.f32 %v1182, 0.0
        %v1186 = vmax.f32 %v1183, 0.0
        %1187 = vst [vmem:[#allocation2 + $0x8] sm:$0xff] %v1184
        %1188 = vst [vmem:[#allocation2 + $0x18] sm:$0xff] %v1185
        %1189 = vst [vmem:[#allocation2 + $0x28] sm:$0xff] %v1186
        %v1190 = vld [vmem:[%s12] sm:$0xff]
        %v1191 = vld [vmem:[%s12 + $0x8] sm:$0xff]
        %v1192 = vld [vmem:[%s12 + $0x10] sm:$0xff]
        %v1193 = vld [vmem:[%s14] sm:$0xff]
        %v1194 = vld [vmem:[%s14 + $0x8] sm:$0xff]
        %v1195 = vld [vmem:[%s14 + $0x10] sm:$0xff]
        %s1196 = scalar_lea.vmem %s11, 48
        %v1197 = vld [vmem:[%s1196] sm:$0xff]
        %v1198 = vld [vmem:[%s1196 + $0x8] sm:$0xff]
        %v1199 = vld [vmem:[%s1196 + $0x10] sm:$0xff]
        %v1200 = vld [vmem:[#allocation2 + $0x8] sm:$0xff]
        %v1201 = vld [vmem:[#allocation2 + $0x18] sm:$0xff]
        %v1202 = vld [vmem:[#allocation2 + $0x28] sm:$0xff]
        %v1203 = vld [vmem:[%s11] sm:$0xff]
        %v1204 = vld [vmem:[%s11 + $0x8] sm:$0xff]
        %v1205 = vld [vmem:[%s11 + $0x10] sm:$0xff]
        %v1206 = vld [vmem:[#allocation2] sm:$0xff]
        %v1207 = vld [vmem:[#allocation2 + $0x10] sm:$0xff]
        %v1208 = vld [vmem:[#allocation2 + $0x20] sm:$0xff]
        %1215 = vrot.lane.b32.xlu0 %v1206, 2
        %v1216 = vpop.permute.xlu0 %1215
        %1217 = vrot.lane.b32.xlu0 %v1200, 2
        %v1218 = vpop.permute.xlu0 %1217
        %1219 = vrot.lane.b32.xlu0 %v1207, 2
        %v1220 = vpop.permute.xlu0 %1219
        %1221 = vrot.lane.b32.xlu0 %v1201, 2
        %v1222 = vpop.permute.xlu0 %1221
        %1223 = vrot.lane.b32.xlu0 %v1208, 2
        %v1224 = vpop.permute.xlu0 %1223
        %1225 = vrot.lane.b32.xlu0 %v1202, 2
        %v1226 = vpop.permute.xlu0 %1225
        %vm1227 = vcmask 15360
        %v1228 = vsel %vm1227, %v1216, %v1218
        %v1229 = vsel %vm1227, %v1220, %v1222
        %v1230 = vsel %vm1227, %v1224, %v1226
        %vm1234 = vcmask 195584
        %v1236 = vsel %vm1234, %v1203, 0
        %v1239 = vsel %vm1234, %v1204, 0
        %v1242 = vsel %vm1234, %v1205, 0
        %1244 = vmatprep.subr.mxu0 0.0
        %1245 = vmatpush1.msra.mxu0 %v1228
        %1246 = vmatprep.subr.mxu0 0.0
        %1247 = vmatpush1.msra.mxu0 %v1229
        %1248 = vmatprep.subr.mxu0 0.0
        %1249 = vmatpush1.msra.mxu0 %v1230
        %1250 = vmatprep.subr.mxu0 0.0
        %1251 = vmatpush1.msra.mxu0 0.0
        %1252 = vmatprep.subr.mxu0 0.0
        %1253 = vmatpush1.msra.mxu0 0.0
        %1254 = vmatprep.subr.mxu0 0.0
        %1255 = vmatpush1.msra.mxu0 0.0
        %1256 = vmatprep.subr.mxu0 0.0
        %1257 = vmatpush1.msra.mxu0 0.0
        %1258 = vmatprep.subr.mxu0 0.0
        %1259 = vmatpush1.msra.mxu0 0.0
        %1260 = vmatprep.subr.mxu0 0.0
        %1261 = vmatpush1.msra.mxu0 0.0
        %1262 = vmatprep.subr.mxu0 0.0
        %1263 = vmatpush1.msra.mxu0 0.0
        %1264 = vmatprep.subr.mxu0 0.0
        %1265 = vmatpush1.msra.mxu0 0.0
        %1266 = vmatprep.subr.mxu0 0.0
        %1267 = vmatpush1.msra.mxu0 0.0
        %1268 = vmatprep.subr.mxu0 0.0
        %1269 = vmatpush1.msra.mxu0 0.0
        %1270 = vmatprep.subr.mxu0 0.0
        %1271 = vmatpush1.msra.mxu0 0.0
        %1272 = vmatprep.subr.mxu0 0.0
        %1273 = vmatpush1.msra.mxu0 0.0
        %1274 = vmatprep.subr.mxu0 0.0
        %1275 = vmatpush1.msra.mxu0 0.0
        %1276 = vmatprep.subr.mxu0 0.0
        %1277 = vmatpush1.msra.mxu0 0.0
        %1278 = vmatprep.subr.mxu0 0.0
        %1279 = vmatpush1.msra.mxu0 0.0
        %1280 = vmatprep.subr.mxu0 0.0
        %1281 = vmatpush1.msra.mxu0 0.0
        %1282 = vmatprep.subr.mxu0 0.0
        %1283 = vmatpush1.msra.mxu0 0.0
        %1284 = vmatprep.subr.mxu0 0.0
        %1285 = vmatpush1.msra.mxu0 0.0
        %1286 = vmatprep.subr.mxu0 0.0
        %1287 = vmatpush1.msra.mxu0 0.0
        %1288 = vmatprep.subr.mxu0 0.0
        %1289 = vmatpush1.msra.mxu0 0.0
        %1290 = vmatprep.subr.mxu0 0.0
        %1291 = vmatpush1.msra.mxu0 0.0
        %1292 = vmatprep.subr.mxu0 0.0
        %1293 = vmatpush1.msra.mxu0 0.0
        %1294 = vmatprep.subr.mxu0 0.0
        %1295 = vmatpush1.msra.mxu0 0.0
        %1296 = vmatprep.subr.mxu0 0.0
        %1297 = vmatpush1.msra.mxu0 0.0
        %1298 = vmatprep.subr.mxu0 0.0
        %1299 = vmatpush1.msra.mxu0 0.0
        %1300 = vmatprep.subr.mxu0 0.0
        %1301 = vmatpush1.msra.mxu0 0.0
        %1302 = vmatprep.subr.mxu0 0.0
        %1303 = vmatpush1.msra.mxu0 0.0
        %1304 = vmatprep.subr.mxu0 0.0
        %1305 = vmatpush1.msra.mxu0 0.0
        %1306 = vmatprep.subr.mxu0 0.0
        %1307 = vmatpush1.msra.mxu0 0.0
        %1308 = vmatprep.mubr.f32.mxu0 0.0
        %1309 = vmatmul.mubr.f32.gmra.mrb[0].mxu0 %v1236
        %v1310 = vpop.f32.mrb[0].mxu0
        %v1311 = vadd.f32 0.0, %v1310
        %v1312 = vpop.f32.mrb[0].mxu0
        %1313 = vmatprep.mubr.f32.mxu0 0.0
        %1314 = vmatmul.mubr.f32.gmra.mrb[0].mxu0 %v1239
        %v1315 = vpop.f32.mrb[0].mxu0
        %v1316 = vadd.f32 0.0, %v1315
        %v1317 = vpop.f32.mrb[0].mxu0
        %1318 = vmatprep.mubr.f32.mxu0 0.0
        %1319 = vmatmul.mubr.f32.gmra.mrb[0].mxu0 %v1242
        %v1320 = vpop.f32.mrb[0].mxu0
        %v1321 = vadd.f32 0.0, %v1320
        %v1322 = vpop.f32.mrb[0].mxu0
        %1323 = vdwg.mxu0
        %v1325 = vsel %vm1234, %v1197, 0
        %v1328 = vsel %vm1234, %v1198, 0
        %v1331 = vsel %vm1234, %v1199, 0
        %1333 = vmatprep.subr.mxu0 0.0
        %1334 = vmatpush1.msra.mxu0 %v1200
        %1335 = vmatprep.subr.mxu0 0.0
        %1336 = vmatpush1.msra.mxu0 %v1201
        %1337 = vmatprep.subr.mxu0 0.0
        %1338 = vmatpush1.msra.mxu0 %v1202
        %1339 = vmatprep.subr.mxu0 0.0
        %1340 = vmatpush1.msra.mxu0 0.0
        %1341 = vmatprep.subr.mxu0 0.0
        %1342 = vmatpush1.msra.mxu0 0.0
        %1343 = vmatprep.subr.mxu0 0.0
        %1344 = vmatpush1.msra.mxu0 0.0
        %1345 = vmatprep.subr.mxu0 0.0
        %1346 = vmatpush1.msra.mxu0 0.0
        %1347 = vmatprep.subr.mxu0 0.0
        %1348 = vmatpush1.msra.mxu0 0.0
        %1349 = vmatprep.subr.mxu0 0.0
        %1350 = vmatpush1.msra.mxu0 0.0
        %1351 = vmatprep.subr.mxu0 0.0
        %1352 = vmatpush1.msra.mxu0 0.0
        %1353 = vmatprep.subr.mxu0 0.0
        %1354 = vmatpush1.msra.mxu0 0.0
        %1355 = vmatprep.subr.mxu0 0.0
        %1356 = vmatpush1.msra.mxu0 0.0
        %1357 = vmatprep.subr.mxu0 0.0
        %1358 = vmatpush1.msra.mxu0 0.0
        %1359 = vmatprep.subr.mxu0 0.0
        %1360 = vmatpush1.msra.mxu0 0.0
        %1361 = vmatprep.subr.mxu0 0.0
        %1362 = vmatpush1.msra.mxu0 0.0
        %1363 = vmatprep.subr.mxu0 0.0
        %1364 = vmatpush1.msra.mxu0 0.0
        %1365 = vmatprep.subr.mxu0 0.0
        %1366 = vmatpush1.msra.mxu0 0.0
        %1367 = vmatprep.subr.mxu0 0.0
        %1368 = vmatpush1.msra.mxu0 0.0
        %1369 = vmatprep.subr.mxu0 0.0
        %1370 = vmatpush1.msra.mxu0 0.0
        %1371 = vmatprep.subr.mxu0 0.0
        %1372 = vmatpush1.msra.mxu0 0.0
        %1373 = vmatprep.subr.mxu0 0.0
        %1374 = vmatpush1.msra.mxu0 0.0
        %1375 = vmatprep.subr.mxu0 0.0
        %1376 = vmatpush1.msra.mxu0 0.0
        %1377 = vmatprep.subr.mxu0 0.0
        %1378 = vmatpush1.msra.mxu0 0.0
        %1379 = vmatprep.subr.mxu0 0.0
        %1380 = vmatpush1.msra.mxu0 0.0
        %1381 = vmatprep.subr.mxu0 0.0
        %1382 = vmatpush1.msra.mxu0 0.0
        %1383 = vmatprep.subr.mxu0 0.0
        %1384 = vmatpush1.msra.mxu0 0.0
        %1385 = vmatprep.subr.mxu0 0.0
        %1386 = vmatpush1.msra.mxu0 0.0
        %1387 = vmatprep.subr.mxu0 0.0
        %1388 = vmatpush1.msra.mxu0 0.0
        %1389 = vmatprep.subr.mxu0 0.0
        %1390 = vmatpush1.msra.mxu0 0.0
        %1391 = vmatprep.subr.mxu0 0.0
        %1392 = vmatpush1.msra.mxu0 0.0
        %1393 = vmatprep.subr.mxu0 0.0
        %1394 = vmatpush1.msra.mxu0 0.0
        %1395 = vmatprep.subr.mxu0 0.0
        %1396 = vmatpush1.msra.mxu0 0.0
        %1397 = vmatprep.mubr.f32.mxu0 0.0
        %1398 = vmatmul.mubr.f32.gmra.mrb[0].mxu0 %v1325
        %v1399 = vpop.f32.mrb[0].mxu0
        %v1400 = vadd.f32 %v1311, %v1399
        %v1401 = vpop.f32.mrb[0].mxu0
        %1402 = vmatprep.mubr.f32.mxu0 0.0
        %1403 = vmatmul.mubr.f32.gmra.mrb[0].mxu0 %v1328
        %v1404 = vpop.f32.mrb[0].mxu0
        %v1405 = vadd.f32 %v1316, %v1404
        %v1406 = vpop.f32.mrb[0].mxu0
        %1407 = vmatprep.mubr.f32.mxu0 0.0
        %1408 = vmatmul.mubr.f32.gmra.mrb[0].mxu0 %v1331
        %v1409 = vpop.f32.mrb[0].mxu0
        %v1410 = vadd.f32 %v1321, %v1409
        %v1411 = vpop.f32.mrb[0].mxu0
        %1412 = vdwg.mxu0
        %s1413 = scalar_lea.vmem %s11, 24
        %v1414 = vld [vmem:[%s1413] sm:$0xff]
        %v1415 = vld [vmem:[%s1413 + $0x8] sm:$0xff]
        %v1416 = vld [vmem:[%s1413 + $0x10] sm:$0xff]
        %1417 = vrot.lane.b32.xlu0 %v1206, 1
        %v1418 = vpop.permute.xlu0 %1417
        %1419 = vrot.lane.b32.xlu0 %v1200, 1
        %v1420 = vpop.permute.xlu0 %1419
        %1421 = vrot.lane.b32.xlu0 %v1207, 1
        %v1422 = vpop.permute.xlu0 %1421
        %1423 = vrot.lane.b32.xlu0 %v1201, 1
        %v1424 = vpop.permute.xlu0 %1423
        %1425 = vrot.lane.b32.xlu0 %v1208, 1
        %v1426 = vpop.permute.xlu0 %1425
        %1427 = vrot.lane.b32.xlu0 %v1202, 1
        %v1428 = vpop.permute.xlu0 %1427
        %vm1429 = vcmask 7168
        %v1430 = vsel %vm1429, %v1418, %v1420
        %v1431 = vsel %vm1429, %v1422, %v1424
        %v1432 = vsel %vm1429, %v1426, %v1428
        %v1437 = vsel %vm1234, %v1414, 0
        %v1440 = vsel %vm1234, %v1415, 0
        %v1443 = vsel %vm1234, %v1416, 0
        %1445 = vmatprep.subr.mxu0 0.0
        %1446 = vmatpush1.msra.mxu0 %v1430
        %1447 = vmatprep.subr.mxu0 0.0
        %1448 = vmatpush1.msra.mxu0 %v1431
        %1449 = vmatprep.subr.mxu0 0.0
        %1450 = vmatpush1.msra.mxu0 %v1432
        %1451 = vmatprep.subr.mxu0 0.0
        %1452 = vmatpush1.msra.mxu0 0.0
        %1453 = vmatprep.subr.mxu0 0.0
        %1454 = vmatpush1.msra.mxu0 0.0
        %1455 = vmatprep.subr.mxu0 0.0
        %1456 = vmatpush1.msra.mxu0 0.0
        %1457 = vmatprep.subr.mxu0 0.0
        %1458 = vmatpush1.msra.mxu0 0.0
        %1459 = vmatprep.subr.mxu0 0.0
        %1460 = vmatpush1.msra.mxu0 0.0
        %1461 = vmatprep.subr.mxu0 0.0
        %1462 = vmatpush1.msra.mxu0 0.0
        %1463 = vmatprep.subr.mxu0 0.0
        %1464 = vmatpush1.msra.mxu0 0.0
        %1465 = vmatprep.subr.mxu0 0.0
        %1466 = vmatpush1.msra.mxu0 0.0
        %1467 = vmatprep.subr.mxu0 0.0
        %1468 = vmatpush1.msra.mxu0 0.0
        %1469 = vmatprep.subr.mxu0 0.0
        %1470 = vmatpush1.msra.mxu0 0.0
        %1471 = vmatprep.subr.mxu0 0.0
        %1472 = vmatpush1.msra.mxu0 0.0
        %1473 = vmatprep.subr.mxu0 0.0
        %1474 = vmatpush1.msra.mxu0 0.0
        %1475 = vmatprep.subr.mxu0 0.0
        %1476 = vmatpush1.msra.mxu0 0.0
        %1477 = vmatprep.subr.mxu0 0.0
        %1478 = vmatpush1.msra.mxu0 0.0
        %1479 = vmatprep.subr.mxu0 0.0
        %1480 = vmatpush1.msra.mxu0 0.0
        %1481 = vmatprep.subr.mxu0 0.0
        %1482 = vmatpush1.msra.mxu0 0.0
        %1483 = vmatprep.subr.mxu0 0.0
        %1484 = vmatpush1.msra.mxu0 0.0
        %1485 = vmatprep.subr.mxu0 0.0
        %1486 = vmatpush1.msra.mxu0 0.0
        %1487 = vmatprep.subr.mxu0 0.0
        %1488 = vmatpush1.msra.mxu0 0.0
        %1489 = vmatprep.subr.mxu0 0.0
        %1490 = vmatpush1.msra.mxu0 0.0
        %1491 = vmatprep.subr.mxu0 0.0
        %1492 = vmatpush1.msra.mxu0 0.0
        %1493 = vmatprep.subr.mxu0 0.0
        %1494 = vmatpush1.msra.mxu0 0.0
        %1495 = vmatprep.subr.mxu0 0.0
        %1496 = vmatpush1.msra.mxu0 0.0
        %1497 = vmatprep.subr.mxu0 0.0
        %1498 = vmatpush1.msra.mxu0 0.0
        %1499 = vmatprep.subr.mxu0 0.0
        %1500 = vmatpush1.msra.mxu0 0.0
        %1501 = vmatprep.subr.mxu0 0.0
        %1502 = vmatpush1.msra.mxu0 0.0
        %1503 = vmatprep.subr.mxu0 0.0
        %1504 = vmatpush1.msra.mxu0 0.0
        %1505 = vmatprep.subr.mxu0 0.0
        %1506 = vmatpush1.msra.mxu0 0.0
        %1507 = vmatprep.subr.mxu0 0.0
        %1508 = vmatpush1.msra.mxu0 0.0
        %1509 = vmatprep.mubr.f32.mxu0 0.0
        %1510 = vmatmul.mubr.f32.gmra.mrb[0].mxu0 %v1437
        %v1511 = vpop.f32.mrb[0].mxu0
        %v1512 = vadd.f32 0.0, %v1511
        %v1513 = vpop.f32.mrb[0].mxu0
        %1514 = vmatprep.mubr.f32.mxu0 0.0
        %1515 = vmatmul.mubr.f32.gmra.mrb[0].mxu0 %v1440
        %v1516 = vpop.f32.mrb[0].mxu0
        %v1517 = vadd.f32 0.0, %v1516
        %v1518 = vpop.f32.mrb[0].mxu0
        %1519 = vmatprep.mubr.f32.mxu0 0.0
        %1520 = vmatmul.mubr.f32.gmra.mrb[0].mxu0 %v1443
        %v1521 = vpop.f32.mrb[0].mxu0
        %v1522 = vadd.f32 0.0, %v1521
        %v1523 = vpop.f32.mrb[0].mxu0
        %1524 = vdwg.mxu0
        %v1525 = vadd.f32 %v1400, %v1512
        %v1526 = vadd.f32 %v1405, %v1517
        %v1527 = vadd.f32 %v1410, %v1522
        %1529 = vset.pattern.permute.xlu0 0
        %1530 = vperm.xlu0 %1529, %v1190
        %v1531 = vpop.permute.xlu0 %1530
        %1534 = vset.pattern.permute.xlu0 0
        %1535 = vperm.xlu0 %1534, %v1191
        %v1536 = vpop.permute.xlu0 %1535
        %1539 = vset.pattern.permute.xlu0 0
        %1540 = vperm.xlu0 %1539, %v1192
        %v1541 = vpop.permute.xlu0 %1540
        %v1543 = vadd.f32 %v1525, %v1531
        %v1544 = vadd.f32 %v1526, %v1536
        %v1545 = vadd.f32 %v1527, %v1541
        %v1546 = vmax.f32 %v1543, 0.0
        %v1547 = vmax.f32 %v1544, 0.0
        %v1548 = vmax.f32 %v1545, 0.0
        %1549 = vst [vmem:[#allocation3 + $0x8] sm:$0xff] %v1546
        %1550 = vst [vmem:[#allocation3 + $0x18] sm:$0xff] %v1547
        %1551 = vst [vmem:[#allocation3 + $0x28] sm:$0xff] %v1548
        %s1552 = scalar_lea.vmem %s13, 48
        %v1553 = vld [vmem:[%s1552] sm:$0xff]
        %v1554 = vld [vmem:[%s1552 + $0x8] sm:$0xff]
        %v1555 = vld [vmem:[%s1552 + $0x10] sm:$0xff]
        %v1556 = vld [vmem:[#allocation3 + $0x8] sm:$0xff]
        %v1557 = vld [vmem:[#allocation3 + $0x18] sm:$0xff]
        %v1558 = vld [vmem:[#allocation3 + $0x28] sm:$0xff]
        %v1559 = vld [vmem:[%s13] sm:$0xff]
        %v1560 = vld [vmem:[%s13 + $0x8] sm:$0xff]
        %v1561 = vld [vmem:[%s13 + $0x10] sm:$0xff]
        %v1562 = vld [vmem:[#allocation3] sm:$0xff]
        %v1563 = vld [vmem:[#allocation3 + $0x10] sm:$0xff]
        %v1564 = vld [vmem:[#allocation3 + $0x20] sm:$0xff]
        %1571 = vrot.lane.b32.xlu0 %v1562, 2
        %v1572 = vpop.permute.xlu0 %1571
        %1573 = vrot.lane.b32.xlu0 %v1556, 2
        %v1574 = vpop.permute.xlu0 %1573
        %1575 = vrot.lane.b32.xlu0 %v1563, 2
        %v1576 = vpop.permute.xlu0 %1575
        %1577 = vrot.lane.b32.xlu0 %v1557, 2
        %v1578 = vpop.permute.xlu0 %1577
        %1579 = vrot.lane.b32.xlu0 %v1564, 2
        %v1580 = vpop.permute.xlu0 %1579
        %1581 = vrot.lane.b32.xlu0 %v1558, 2
        %v1582 = vpop.permute.xlu0 %1581
        %v1583 = vsel %vm1227, %v1572, %v1574
        %v1584 = vsel %vm1227, %v1576, %v1578
        %v1585 = vsel %vm1227, %v1580, %v1582
        %v1590 = vsel %vm1234, %v1559, 0
        %v1593 = vsel %vm1234, %v1560, 0
        %v1596 = vsel %vm1234, %v1561, 0
        %1598 = vmatprep.subr.mxu0 0.0
        %1599 = vmatpush1.msra.mxu0 %v1583
        %1600 = vmatprep.subr.mxu0 0.0
        %1601 = vmatpush1.msra.mxu0 %v1584
        %1602 = vmatprep.subr.mxu0 0.0
        %1603 = vmatpush1.msra.mxu0 %v1585
        %1604 = vmatprep.subr.mxu0 0.0
        %1605 = vmatpush1.msra.mxu0 0.0
        %1606 = vmatprep.subr.mxu0 0.0
        %1607 = vmatpush1.msra.mxu0 0.0
        %1608 = vmatprep.subr.mxu0 0.0
        %1609 = vmatpush1.msra.mxu0 0.0
        %1610 = vmatprep.subr.mxu0 0.0
        %1611 = vmatpush1.msra.mxu0 0.0
        %1612 = vmatprep.subr.mxu0 0.0
        %1613 = vmatpush1.msra.mxu0 0.0
        %1614 = vmatprep.subr.mxu0 0.0
        %1615 = vmatpush1.msra.mxu0 0.0
        %1616 = vmatprep.subr.mxu0 0.0
        %1617 = vmatpush1.msra.mxu0 0.0
        %1618 = vmatprep.subr.mxu0 0.0
        %1619 = vmatpush1.msra.mxu0 0.0
        %1620 = vmatprep.subr.mxu0 0.0
        %1621 = vmatpush1.msra.mxu0 0.0
        %1622 = vmatprep.subr.mxu0 0.0
        %1623 = vmatpush1.msra.mxu0 0.0
        %1624 = vmatprep.subr.mxu0 0.0
        %1625 = vmatpush1.msra.mxu0 0.0
        %1626 = vmatprep.subr.mxu0 0.0
        %1627 = vmatpush1.msra.mxu0 0.0
        %1628 = vmatprep.subr.mxu0 0.0
        %1629 = vmatpush1.msra.mxu0 0.0
        %1630 = vmatprep.subr.mxu0 0.0
        %1631 = vmatpush1.msra.mxu0 0.0
        %1632 = vmatprep.subr.mxu0 0.0
        %1633 = vmatpush1.msra.mxu0 0.0
        %1634 = vmatprep.subr.mxu0 0.0
        %1635 = vmatpush1.msra.mxu0 0.0
        %1636 = vmatprep.subr.mxu0 0.0
        %1637 = vmatpush1.msra.mxu0 0.0
        %1638 = vmatprep.subr.mxu0 0.0
        %1639 = vmatpush1.msra.mxu0 0.0
        %1640 = vmatprep.subr.mxu0 0.0
        %1641 = vmatpush1.msra.mxu0 0.0
        %1642 = vmatprep.subr.mxu0 0.0
        %1643 = vmatpush1.msra.mxu0 0.0
        %1644 = vmatprep.subr.mxu0 0.0
        %1645 = vmatpush1.msra.mxu0 0.0
        %1646 = vmatprep.subr.mxu0 0.0
        %1647 = vmatpush1.msra.mxu0 0.0
        %1648 = vmatprep.subr.mxu0 0.0
        %1649 = vmatpush1.msra.mxu0 0.0
        %1650 = vmatprep.subr.mxu0 0.0
        %1651 = vmatpush1.msra.mxu0 0.0
        %1652 = vmatprep.subr.mxu0 0.0
        %1653 = vmatpush1.msra.mxu0 0.0
        %1654 = vmatprep.subr.mxu0 0.0
        %1655 = vmatpush1.msra.mxu0 0.0
        %1656 = vmatprep.subr.mxu0 0.0
        %1657 = vmatpush1.msra.mxu0 0.0
        %1658 = vmatprep.subr.mxu0 0.0
        %1659 = vmatpush1.msra.mxu0 0.0
        %1660 = vmatprep.subr.mxu0 0.0
        %1661 = vmatpush1.msra.mxu0 0.0
        %1662 = vmatprep.mubr.f32.mxu0 0.0
        %1663 = vmatmul.mubr.f32.gmra.mrb[0].mxu0 %v1590
        %v1664 = vpop.f32.mrb[0].mxu0
        %v1665 = vadd.f32 0.0, %v1664
        %v1666 = vpop.f32.mrb[0].mxu0
        %1667 = vmatprep.mubr.f32.mxu0 0.0
        %1668 = vmatmul.mubr.f32.gmra.mrb[0].mxu0 %v1593
        %v1669 = vpop.f32.mrb[0].mxu0
        %v1670 = vadd.f32 0.0, %v1669
        %v1671 = vpop.f32.mrb[0].mxu0
        %1672 = vmatprep.mubr.f32.mxu0 0.0
        %1673 = vmatmul.mubr.f32.gmra.mrb[0].mxu0 %v1596
        %v1674 = vpop.f32.mrb[0].mxu0
        %v1675 = vadd.f32 0.0, %v1674
        %v1676 = vpop.f32.mrb[0].mxu0
        %1677 = vdwg.mxu0
        %v1679 = vsel %vm1234, %v1553, 0
        %v1682 = vsel %vm1234, %v1554, 0
        %v1685 = vsel %vm1234, %v1555, 0
        %1687 = vmatprep.subr.mxu0 0.0
        %1688 = vmatpush1.msra.mxu0 %v1556
        %1689 = vmatprep.subr.mxu0 0.0
        %1690 = vmatpush1.msra.mxu0 %v1557
        %1691 = vmatprep.subr.mxu0 0.0
        %1692 = vmatpush1.msra.mxu0 %v1558
        %1693 = vmatprep.subr.mxu0 0.0
        %1694 = vmatpush1.msra.mxu0 0.0
        %1695 = vmatprep.subr.mxu0 0.0
        %1696 = vmatpush1.msra.mxu0 0.0
        %1697 = vmatprep.subr.mxu0 0.0
        %1698 = vmatpush1.msra.mxu0 0.0
        %1699 = vmatprep.subr.mxu0 0.0
        %1700 = vmatpush1.msra.mxu0 0.0
        %1701 = vmatprep.subr.mxu0 0.0
        %1702 = vmatpush1.msra.mxu0 0.0
        %1703 = vmatprep.subr.mxu0 0.0
        %1704 = vmatpush1.msra.mxu0 0.0
        %1705 = vmatprep.subr.mxu0 0.0
        %1706 = vmatpush1.msra.mxu0 0.0
        %1707 = vmatprep.subr.mxu0 0.0
        %1708 = vmatpush1.msra.mxu0 0.0
        %1709 = vmatprep.subr.mxu0 0.0
        %1710 = vmatpush1.msra.mxu0 0.0
        %1711 = vmatprep.subr.mxu0 0.0
        %1712 = vmatpush1.msra.mxu0 0.0
        %1713 = vmatprep.subr.mxu0 0.0
        %1714 = vmatpush1.msra.mxu0 0.0
        %1715 = vmatprep.subr.mxu0 0.0
        %1716 = vmatpush1.msra.mxu0 0.0
        %1717 = vmatprep.subr.mxu0 0.0
        %1718 = vmatpush1.msra.mxu0 0.0
        %1719 = vmatprep.subr.mxu0 0.0
        %1720 = vmatpush1.msra.mxu0 0.0
        %1721 = vmatprep.subr.mxu0 0.0
        %1722 = vmatpush1.msra.mxu0 0.0
        %1723 = vmatprep.subr.mxu0 0.0
        %1724 = vmatpush1.msra.mxu0 0.0
        %1725 = vmatprep.subr.mxu0 0.0
        %1726 = vmatpush1.msra.mxu0 0.0
        %1727 = vmatprep.subr.mxu0 0.0
        %1728 = vmatpush1.msra.mxu0 0.0
        %1729 = vmatprep.subr.mxu0 0.0
        %1730 = vmatpush1.msra.mxu0 0.0
        %1731 = vmatprep.subr.mxu0 0.0
        %1732 = vmatpush1.msra.mxu0 0.0
        %1733 = vmatprep.subr.mxu0 0.0
        %1734 = vmatpush1.msra.mxu0 0.0
        %1735 = vmatprep.subr.mxu0 0.0
        %1736 = vmatpush1.msra.mxu0 0.0
        %1737 = vmatprep.subr.mxu0 0.0
        %1738 = vmatpush1.msra.mxu0 0.0
        %1739 = vmatprep.subr.mxu0 0.0
        %1740 = vmatpush1.msra.mxu0 0.0
        %1741 = vmatprep.subr.mxu0 0.0
        %1742 = vmatpush1.msra.mxu0 0.0
        %1743 = vmatprep.subr.mxu0 0.0
        %1744 = vmatpush1.msra.mxu0 0.0
        %1745 = vmatprep.subr.mxu0 0.0
        %1746 = vmatpush1.msra.mxu0 0.0
        %1747 = vmatprep.subr.mxu0 0.0
        %1748 = vmatpush1.msra.mxu0 0.0
        %1749 = vmatprep.subr.mxu0 0.0
        %1750 = vmatpush1.msra.mxu0 0.0
        %1751 = vmatprep.mubr.f32.mxu0 0.0
        %1752 = vmatmul.mubr.f32.gmra.mrb[0].mxu0 %v1679
        %v1753 = vpop.f32.mrb[0].mxu0
        %v1754 = vadd.f32 %v1665, %v1753
        %v1755 = vpop.f32.mrb[0].mxu0
        %1756 = vmatprep.mubr.f32.mxu0 0.0
        %1757 = vmatmul.mubr.f32.gmra.mrb[0].mxu0 %v1682
        %v1758 = vpop.f32.mrb[0].mxu0
        %v1759 = vadd.f32 %v1670, %v1758
        %v1760 = vpop.f32.mrb[0].mxu0
        %1761 = vmatprep.mubr.f32.mxu0 0.0
        %1762 = vmatmul.mubr.f32.gmra.mrb[0].mxu0 %v1685
        %v1763 = vpop.f32.mrb[0].mxu0
        %v1764 = vadd.f32 %v1675, %v1763
        %v1765 = vpop.f32.mrb[0].mxu0
        %1766 = vdwg.mxu0
        %s1767 = scalar_lea.vmem %s13, 24
        %v1768 = vld [vmem:[%s1767] sm:$0xff]
        %v1769 = vld [vmem:[%s1767 + $0x8] sm:$0xff]
        %v1770 = vld [vmem:[%s1767 + $0x10] sm:$0xff]
        %1771 = vrot.lane.b32.xlu0 %v1562, 1
        %v1772 = vpop.permute.xlu0 %1771
        %1773 = vrot.lane.b32.xlu0 %v1556, 1
        %v1774 = vpop.permute.xlu0 %1773
        %1775 = vrot.lane.b32.xlu0 %v1563, 1
        %v1776 = vpop.permute.xlu0 %1775
        %1777 = vrot.lane.b32.xlu0 %v1557, 1
        %v1778 = vpop.permute.xlu0 %1777
        %1779 = vrot.lane.b32.xlu0 %v1564, 1
        %v1780 = vpop.permute.xlu0 %1779
        %1781 = vrot.lane.b32.xlu0 %v1558, 1
        %v1782 = vpop.permute.xlu0 %1781
        %v1783 = vsel %vm1429, %v1772, %v1774
        %v1784 = vsel %vm1429, %v1776, %v1778
        %v1785 = vsel %vm1429, %v1780, %v1782
        %v1790 = vsel %vm1234, %v1768, 0
        %v1793 = vsel %vm1234, %v1769, 0
        %v1796 = vsel %vm1234, %v1770, 0
        %1798 = vmatprep.subr.mxu0 0.0
        %1799 = vmatpush1.msra.mxu0 %v1783
        %1800 = vmatprep.subr.mxu0 0.0
        %1801 = vmatpush1.msra.mxu0 %v1784
        %1802 = vmatprep.subr.mxu0 0.0
        %1803 = vmatpush1.msra.mxu0 %v1785
        %1804 = vmatprep.subr.mxu0 0.0
        %1805 = vmatpush1.msra.mxu0 0.0
        %1806 = vmatprep.subr.mxu0 0.0
        %1807 = vmatpush1.msra.mxu0 0.0
        %1808 = vmatprep.subr.mxu0 0.0
        %1809 = vmatpush1.msra.mxu0 0.0
        %1810 = vmatprep.subr.mxu0 0.0
        %1811 = vmatpush1.msra.mxu0 0.0
        %1812 = vmatprep.subr.mxu0 0.0
        %1813 = vmatpush1.msra.mxu0 0.0
        %1814 = vmatprep.subr.mxu0 0.0
        %1815 = vmatpush1.msra.mxu0 0.0
        %1816 = vmatprep.subr.mxu0 0.0
        %1817 = vmatpush1.msra.mxu0 0.0
        %1818 = vmatprep.subr.mxu0 0.0
        %1819 = vmatpush1.msra.mxu0 0.0
        %1820 = vmatprep.subr.mxu0 0.0
        %1821 = vmatpush1.msra.mxu0 0.0
        %1822 = vmatprep.subr.mxu0 0.0
        %1823 = vmatpush1.msra.mxu0 0.0
        %1824 = vmatprep.subr.mxu0 0.0
        %1825 = vmatpush1.msra.mxu0 0.0
        %1826 = vmatprep.subr.mxu0 0.0
        %1827 = vmatpush1.msra.mxu0 0.0
        %1828 = vmatprep.subr.mxu0 0.0
        %1829 = vmatpush1.msra.mxu0 0.0
        %1830 = vmatprep.subr.mxu0 0.0
        %1831 = vmatpush1.msra.mxu0 0.0
        %1832 = vmatprep.subr.mxu0 0.0
        %1833 = vmatpush1.msra.mxu0 0.0
        %1834 = vmatprep.subr.mxu0 0.0
        %1835 = vmatpush1.msra.mxu0 0.0
        %1836 = vmatprep.subr.mxu0 0.0
        %1837 = vmatpush1.msra.mxu0 0.0
        %1838 = vmatprep.subr.mxu0 0.0
        %1839 = vmatpush1.msra.mxu0 0.0
        %1840 = vmatprep.subr.mxu0 0.0
        %1841 = vmatpush1.msra.mxu0 0.0
        %1842 = vmatprep.subr.mxu0 0.0
        %1843 = vmatpush1.msra.mxu0 0.0
        %1844 = vmatprep.subr.mxu0 0.0
        %1845 = vmatpush1.msra.mxu0 0.0
        %1846 = vmatprep.subr.mxu0 0.0
        %1847 = vmatpush1.msra.mxu0 0.0
        %1848 = vmatprep.subr.mxu0 0.0
        %1849 = vmatpush1.msra.mxu0 0.0
        %1850 = vmatprep.subr.mxu0 0.0
        %1851 = vmatpush1.msra.mxu0 0.0
        %1852 = vmatprep.subr.mxu0 0.0
        %1853 = vmatpush1.msra.mxu0 0.0
        %1854 = vmatprep.subr.mxu0 0.0
        %1855 = vmatpush1.msra.mxu0 0.0
        %1856 = vmatprep.subr.mxu0 0.0
        %1857 = vmatpush1.msra.mxu0 0.0
        %1858 = vmatprep.subr.mxu0 0.0
        %1859 = vmatpush1.msra.mxu0 0.0
        %1860 = vmatprep.subr.mxu0 0.0
        %1861 = vmatpush1.msra.mxu0 0.0
        %1862 = vmatprep.mubr.f32.mxu0 0.0
        %1863 = vmatmul.mubr.f32.gmra.mrb[0].mxu0 %v1790
        %v1864 = vpop.f32.mrb[0].mxu0
        %v1865 = vadd.f32 0.0, %v1864
        %v1866 = vpop.f32.mrb[0].mxu0
        %1867 = vmatprep.mubr.f32.mxu0 0.0
        %1868 = vmatmul.mubr.f32.gmra.mrb[0].mxu0 %v1793
        %v1869 = vpop.f32.mrb[0].mxu0
        %v1870 = vadd.f32 0.0, %v1869
        %v1871 = vpop.f32.mrb[0].mxu0
        %1872 = vmatprep.mubr.f32.mxu0 0.0
        %1873 = vmatmul.mubr.f32.gmra.mrb[0].mxu0 %v1796
        %v1874 = vpop.f32.mrb[0].mxu0
        %v1875 = vadd.f32 0.0, %v1874
        %v1876 = vpop.f32.mrb[0].mxu0
        %1877 = vdwg.mxu0
        %v1878 = vadd.f32 %v1754, %v1865
        %v1879 = vadd.f32 %v1759, %v1870
        %v1880 = vadd.f32 %v1764, %v1875
        %1882 = vset.pattern.permute.xlu0 0
        %1883 = vperm.xlu0 %1882, %v1193
        %v1884 = vpop.permute.xlu0 %1883
        %1887 = vset.pattern.permute.xlu0 0
        %1888 = vperm.xlu0 %1887, %v1194
        %v1889 = vpop.permute.xlu0 %1888
        %1892 = vset.pattern.permute.xlu0 0
        %1893 = vperm.xlu0 %1892, %v1195
        %v1894 = vpop.permute.xlu0 %1893
        %v1896 = vadd.f32 %v1878, %v1884
        %v1897 = vadd.f32 %v1879, %v1889
        %v1898 = vadd.f32 %v1880, %v1894
        %v1899 = vld [vmem:[#allocation2 + $0x8] sm:$0xff]
        %v1900 = vld [vmem:[#allocation2 + $0x18] sm:$0xff]
        %v1901 = vld [vmem:[#allocation2 + $0x28] sm:$0xff]
        %v1902 = vadd.f32 %v1896, %v1899
        %v1903 = vadd.f32 %v1897, %v1900
        %v1904 = vadd.f32 %v1898, %v1901
        %v1905 = vmax.f32 %v1902, 0.0
        %v1906 = vmax.f32 %v1903, 0.0
        %v1907 = vmax.f32 %v1904, 0.0
        %1908 = vst [vmem:[#allocation2 + $0x8] sm:$0xff] %v1905
        %1909 = vst [vmem:[#allocation2 + $0x18] sm:$0xff] %v1906
        %1910 = vst [vmem:[#allocation2 + $0x28] sm:$0xff] %v1907
        %v1911 = vld [vmem:[%s16] sm:$0xff]
        %v1912 = vld [vmem:[%s18] sm:$0xff]
        %v1913 = vld [vmem:[%s19] sm:$0xff]
        %v1914 = vld [vmem:[%s20] sm:$0xff]
        %s1915 = scalar_lea.vmem %s15, 16
        %v1916 = vld [vmem:[%s1915] sm:$0xff]
        %v1917 = vld [vmem:[#allocation2 + $0x8] sm:$0xff]
        %v1918 = vld [vmem:[#allocation2 + $0x18] sm:$0xff]
        %v1919 = vld [vmem:[#allocation2 + $0x28] sm:$0xff]
        %v1920 = vld [vmem:[%s15] sm:$0xff]
        %v1921 = vld [vmem:[#allocation2] sm:$0xff]
        %v1922 = vld [vmem:[#allocation2 + $0x10] sm:$0xff]
        %v1923 = vld [vmem:[#allocation2 + $0x20] sm:$0xff]
        %1930 = vrot.lane.b32.xlu0 %v1921, 4
        %v1931 = vpop.permute.xlu0 %1930
        %1932 = vrot.lane.b32.xlu0 %v1917, 4
        %v1933 = vpop.permute.xlu0 %1932
        %1934 = vrot.lane.b32.xlu0 %v1922, 4
        %v1935 = vpop.permute.xlu0 %1934
        %1936 = vrot.lane.b32.xlu0 %v1918, 4
        %v1937 = vpop.permute.xlu0 %1936
        %1938 = vrot.lane.b32.xlu0 %v1923, 4
        %v1939 = vpop.permute.xlu0 %1938
        %1940 = vrot.lane.b32.xlu0 %v1919, 4
        %v1941 = vpop.permute.xlu0 %1940
        %vm1942 = vcmask 31744
        %v1943 = vsel %vm1942, %v1931, %v1933
        %v1944 = vsel %vm1942, %v1935, %v1937
        %v1945 = vsel %vm1942, %v1939, %v1941
        %v1950 = vsel %vm1234, %v1920, 0
        %1952 = vmatprep.subr.mxu0 0.0
        %1953 = vmatpush1.msra.mxu0 %v1943
        %1954 = vmatprep.subr.mxu0 0.0
        %1955 = vmatpush1.msra.mxu0 %v1944
        %1956 = vmatprep.subr.mxu0 0.0
        %1957 = vmatpush1.msra.mxu0 %v1945
        %1958 = vmatprep.subr.mxu0 0.0
        %1959 = vmatpush1.msra.mxu0 0.0
        %1960 = vmatprep.subr.mxu0 0.0
        %1961 = vmatpush1.msra.mxu0 0.0
        %1962 = vmatprep.subr.mxu0 0.0
        %1963 = vmatpush1.msra.mxu0 0.0
        %1964 = vmatprep.subr.mxu0 0.0
        %1965 = vmatpush1.msra.mxu0 0.0
        %1966 = vmatprep.subr.mxu0 0.0
        %1967 = vmatpush1.msra.mxu0 0.0
        %1968 = vmatprep.subr.mxu0 0.0
        %1969 = vmatpush1.msra.mxu0 0.0
        %1970 = vmatprep.subr.mxu0 0.0
        %1971 = vmatpush1.msra.mxu0 0.0
        %1972 = vmatprep.subr.mxu0 0.0
        %1973 = vmatpush1.msra.mxu0 0.0
        %1974 = vmatprep.subr.mxu0 0.0
        %1975 = vmatpush1.msra.mxu0 0.0
        %1976 = vmatprep.subr.mxu0 0.0
        %1977 = vmatpush1.msra.mxu0 0.0
        %1978 = vmatprep.subr.mxu0 0.0
        %1979 = vmatpush1.msra.mxu0 0.0
        %1980 = vmatprep.subr.mxu0 0.0
        %1981 = vmatpush1.msra.mxu0 0.0
        %1982 = vmatprep.subr.mxu0 0.0
        %1983 = vmatpush1.msra.mxu0 0.0
        %1984 = vmatprep.subr.mxu0 0.0
        %1985 = vmatpush1.msra.mxu0 0.0
        %1986 = vmatprep.subr.mxu0 0.0
        %1987 = vmatpush1.msra.mxu0 0.0
        %1988 = vmatprep.subr.mxu0 0.0
        %1989 = vmatpush1.msra.mxu0 0.0
        %1990 = vmatprep.subr.mxu0 0.0
        %1991 = vmatpush1.msra.mxu0 0.0
        %1992 = vmatprep.subr.mxu0 0.0
        %1993 = vmatpush1.msra.mxu0 0.0
        %1994 = vmatprep.subr.mxu0 0.0
        %1995 = vmatpush1.msra.mxu0 0.0
        %1996 = vmatprep.subr.mxu0 0.0
        %1997 = vmatpush1.msra.mxu0 0.0
        %1998 = vmatprep.subr.mxu0 0.0
        %1999 = vmatpush1.msra.mxu0 0.0
        %2000 = vmatprep.subr.mxu0 0.0
        %2001 = vmatpush1.msra.mxu0 0.0
        %2002 = vmatprep.subr.mxu0 0.0
        %2003 = vmatpush1.msra.mxu0 0.0
        %2004 = vmatprep.subr.mxu0 0.0
        %2005 = vmatpush1.msra.mxu0 0.0
        %2006 = vmatprep.subr.mxu0 0.0
        %2007 = vmatpush1.msra.mxu0 0.0
        %2008 = vmatprep.subr.mxu0 0.0
        %2009 = vmatpush1.msra.mxu0 0.0
        %2010 = vmatprep.subr.mxu0 0.0
        %2011 = vmatpush1.msra.mxu0 0.0
        %2012 = vmatprep.subr.mxu0 0.0
        %2013 = vmatpush1.msra.mxu0 0.0
        %2014 = vmatprep.subr.mxu0 0.0
        %2015 = vmatpush1.msra.mxu0 0.0
        %2016 = vmatprep.mubr.f32.mxu0 0.0
        %2017 = vmatmul.mubr.f32.gmra.mrb[0].mxu0 %v1950
        %v2018 = vpop.f32.mrb[0].mxu0
        %v2019 = vadd.f32 0.0, %v2018
        %v2020 = vpop.f32.mrb[0].mxu0
        %2021 = vdwg.mxu0
        %v2023 = vsel %vm1234, %v1916, 0
        %2025 = vmatprep.subr.mxu0 0.0
        %2026 = vmatpush1.msra.mxu0 %v1917
        %2027 = vmatprep.subr.mxu0 0.0
        %2028 = vmatpush1.msra.mxu0 %v1918
        %2029 = vmatprep.subr.mxu0 0.0
        %2030 = vmatpush1.msra.mxu0 %v1919
        %2031 = vmatprep.subr.mxu0 0.0
        %2032 = vmatpush1.msra.mxu0 0.0
        %2033 = vmatprep.subr.mxu0 0.0
        %2034 = vmatpush1.msra.mxu0 0.0
        %2035 = vmatprep.subr.mxu0 0.0
        %2036 = vmatpush1.msra.mxu0 0.0
        %2037 = vmatprep.subr.mxu0 0.0
        %2038 = vmatpush1.msra.mxu0 0.0
        %2039 = vmatprep.subr.mxu0 0.0
        %2040 = vmatpush1.msra.mxu0 0.0
        %2041 = vmatprep.subr.mxu0 0.0
        %2042 = vmatpush1.msra.mxu0 0.0
        %2043 = vmatprep.subr.mxu0 0.0
        %2044 = vmatpush1.msra.mxu0 0.0
        %2045 = vmatprep.subr.mxu0 0.0
        %2046 = vmatpush1.msra.mxu0 0.0
        %2047 = vmatprep.subr.mxu0 0.0
        %2048 = vmatpush1.msra.mxu0 0.0
        %2049 = vmatprep.subr.mxu0 0.0
        %2050 = vmatpush1.msra.mxu0 0.0
        %2051 = vmatprep.subr.mxu0 0.0
        %2052 = vmatpush1.msra.mxu0 0.0
        %2053 = vmatprep.subr.mxu0 0.0
        %2054 = vmatpush1.msra.mxu0 0.0
        %2055 = vmatprep.subr.mxu0 0.0
        %2056 = vmatpush1.msra.mxu0 0.0
        %2057 = vmatprep.subr.mxu0 0.0
        %2058 = vmatpush1.msra.mxu0 0.0
        %2059 = vmatprep.subr.mxu0 0.0
        %2060 = vmatpush1.msra.mxu0 0.0
        %2061 = vmatprep.subr.mxu0 0.0
        %2062 = vmatpush1.msra.mxu0 0.0
        %2063 = vmatprep.subr.mxu0 0.0
        %2064 = vmatpush1.msra.mxu0 0.0
        %2065 = vmatprep.subr.mxu0 0.0
        %2066 = vmatpush1.msra.mxu0 0.0
        %2067 = vmatprep.subr.mxu0 0.0
        %2068 = vmatpush1.msra.mxu0 0.0
        %2069 = vmatprep.subr.mxu0 0.0
        %2070 = vmatpush1.msra.mxu0 0.0
        %2071 = vmatprep.subr.mxu0 0.0
        %2072 = vmatpush1.msra.mxu0 0.0
        %2073 = vmatprep.subr.mxu0 0.0
        %2074 = vmatpush1.msra.mxu0 0.0
        %2075 = vmatprep.subr.mxu0 0.0
        %2076 = vmatpush1.msra.mxu0 0.0
        %2077 = vmatprep.subr.mxu0 0.0
        %2078 = vmatpush1.msra.mxu0 0.0
        %2079 = vmatprep.subr.mxu0 0.0
        %2080 = vmatpush1.msra.mxu0 0.0
        %2081 = vmatprep.subr.mxu0 0.0
        %2082 = vmatpush1.msra.mxu0 0.0
        %2083 = vmatprep.subr.mxu0 0.0
        %2084 = vmatpush1.msra.mxu0 0.0
        %2085 = vmatprep.subr.mxu0 0.0
        %2086 = vmatpush1.msra.mxu0 0.0
        %2087 = vmatprep.subr.mxu0 0.0
        %2088 = vmatpush1.msra.mxu0 0.0
        %2089 = vmatprep.mubr.f32.mxu0 0.0
        %2090 = vmatmul.mubr.f32.gmra.mrb[0].mxu0 %v2023
        %v2091 = vpop.f32.mrb[0].mxu0
        %v2092 = vadd.f32 %v2019, %v2091
        %v2093 = vpop.f32.mrb[0].mxu0
        %2094 = vdwg.mxu0
        %s2095 = scalar_lea.vmem %s15, 8
        %v2096 = vld [vmem:[%s2095] sm:$0xff]
        %2097 = vrot.lane.b32.xlu0 %v1921, 2
        %v2098 = vpop.permute.xlu0 %2097
        %2099 = vrot.lane.b32.xlu0 %v1917, 2
        %v2100 = vpop.permute.xlu0 %2099
        %2101 = vrot.lane.b32.xlu0 %v1922, 2
        %v2102 = vpop.permute.xlu0 %2101
        %2103 = vrot.lane.b32.xlu0 %v1918, 2
        %v2104 = vpop.permute.xlu0 %2103
        %2105 = vrot.lane.b32.xlu0 %v1923, 2
        %v2106 = vpop.permute.xlu0 %2105
        %2107 = vrot.lane.b32.xlu0 %v1919, 2
        %v2108 = vpop.permute.xlu0 %2107
        %v2109 = vsel %vm1227, %v2098, %v2100
        %v2110 = vsel %vm1227, %v2102, %v2104
        %v2111 = vsel %vm1227, %v2106, %v2108
        %v2116 = vsel %vm1234, %v2096, 0
        %2118 = vmatprep.subr.mxu0 0.0
        %2119 = vmatpush1.msra.mxu0 %v2109
        %2120 = vmatprep.subr.mxu0 0.0
        %2121 = vmatpush1.msra.mxu0 %v2110
        %2122 = vmatprep.subr.mxu0 0.0
        %2123 = vmatpush1.msra.mxu0 %v2111
        %2124 = vmatprep.subr.mxu0 0.0
        %2125 = vmatpush1.msra.mxu0 0.0
        %2126 = vmatprep.subr.mxu0 0.0
        %2127 = vmatpush1.msra.mxu0 0.0
        %2128 = vmatprep.subr.mxu0 0.0
        %2129 = vmatpush1.msra.mxu0 0.0
        %2130 = vmatprep.subr.mxu0 0.0
        %2131 = vmatpush1.msra.mxu0 0.0
        %2132 = vmatprep.subr.mxu0 0.0
        %2133 = vmatpush1.msra.mxu0 0.0
        %2134 = vmatprep.subr.mxu0 0.0
        %2135 = vmatpush1.msra.mxu0 0.0
        %2136 = vmatprep.subr.mxu0 0.0
        %2137 = vmatpush1.msra.mxu0 0.0
        %2138 = vmatprep.subr.mxu0 0.0
        %2139 = vmatpush1.msra.mxu0 0.0
        %2140 = vmatprep.subr.mxu0 0.0
        %2141 = vmatpush1.msra.mxu0 0.0
        %2142 = vmatprep.subr.mxu0 0.0
        %2143 = vmatpush1.msra.mxu0 0.0
        %2144 = vmatprep.subr.mxu0 0.0
        %2145 = vmatpush1.msra.mxu0 0.0
        %2146 = vmatprep.subr.mxu0 0.0
        %2147 = vmatpush1.msra.mxu0 0.0
        %2148 = vmatprep.subr.mxu0 0.0
        %2149 = vmatpush1.msra.mxu0 0.0
        %2150 = vmatprep.subr.mxu0 0.0
        %2151 = vmatpush1.msra.mxu0 0.0
        %2152 = vmatprep.subr.mxu0 0.0
        %2153 = vmatpush1.msra.mxu0 0.0
        %2154 = vmatprep.subr.mxu0 0.0
        %2155 = vmatpush1.msra.mxu0 0.0
        %2156 = vmatprep.subr.mxu0 0.0
        %2157 = vmatpush1.msra.mxu0 0.0
        %2158 = vmatprep.subr.mxu0 0.0
        %2159 = vmatpush1.msra.mxu0 0.0
        %2160 = vmatprep.subr.mxu0 0.0
        %2161 = vmatpush1.msra.mxu0 0.0
        %2162 = vmatprep.subr.mxu0 0.0
        %2163 = vmatpush1.msra.mxu0 0.0
        %2164 = vmatprep.subr.mxu0 0.0
        %2165 = vmatpush1.msra.mxu0 0.0
        %2166 = vmatprep.subr.mxu0 0.0
        %2167 = vmatpush1.msra.mxu0 0.0
        %2168 = vmatprep.subr.mxu0 0.0
        %2169 = vmatpush1.msra.mxu0 0.0
        %2170 = vmatprep.subr.mxu0 0.0
        %2171 = vmatpush1.msra.mxu0 0.0
        %2172 = vmatprep.subr.mxu0 0.0
        %2173 = vmatpush1.msra.mxu0 0.0
        %2174 = vmatprep.subr.mxu0 0.0
        %2175 = vmatpush1.msra.mxu0 0.0
        %2176 = vmatprep.subr.mxu0 0.0
        %2177 = vmatpush1.msra.mxu0 0.0
        %2178 = vmatprep.subr.mxu0 0.0
        %2179 = vmatpush1.msra.mxu0 0.0
        %2180 = vmatprep.subr.mxu0 0.0
        %2181 = vmatpush1.msra.mxu0 0.0
        %2182 = vmatprep.mubr.f32.mxu0 0.0
        %2183 = vmatmul.mubr.f32.gmra.mrb[0].mxu0 %v2116
        %v2184 = vpop.f32.mrb[0].mxu0
        %v2185 = vadd.f32 0.0, %v2184
        %v2186 = vpop.f32.mrb[0].mxu0
        %2187 = vdwg.mxu0
        %v2188 = vadd.f32 %v2092, %v2185
        %2190 = vset.pattern.permute.xlu0 0
        %2191 = vperm.xlu0 %2190, %v1911
        %v2192 = vpop.permute.xlu0 %2191
        %v2194 = vadd.f32 %v2188, %v2192
        %v2195 = vmax.f32 %v2194, 0.0
        %2196 = vst [vmem:[#allocation3 + $0x8] sm:$0xff] %v2195
        %s2197 = scalar_lea.vmem %s17, 16
        %v2198 = vld [vmem:[%s2197] sm:$0xff]
        %v2199 = vld [vmem:[#allocation3 + $0x8] sm:$0xff]
        %v2200 = vld [vmem:[%s17] sm:$0xff]
        %v2201 = vld [vmem:[#allocation3] sm:$0xff]
        %2204 = vrot.lane.b32.xlu0 %v2201, 4
        %v2205 = vpop.permute.xlu0 %2204
        %2206 = vrot.lane.b32.xlu0 %v2199, 4
        %v2207 = vpop.permute.xlu0 %2206
        %v2208 = vsel %vm1942, %v2205, %v2207
        %v2211 = vsel %vm904, %v2200, 0
        %2213 = vmatprep.subr.mxu0 0.0
        %2214 = vmatpush1.msra.mxu0 %v2208
        %2215 = vmatprep.subr.mxu0 0.0
        %2216 = vmatpush1.msra.mxu0 0.0
        %2217 = vmatprep.subr.mxu0 0.0
        %2218 = vmatpush1.msra.mxu0 0.0
        %2219 = vmatprep.subr.mxu0 0.0
        %2220 = vmatpush1.msra.mxu0 0.0
        %2221 = vmatprep.subr.mxu0 0.0
        %2222 = vmatpush1.msra.mxu0 0.0
        %2223 = vmatprep.subr.mxu0 0.0
        %2224 = vmatpush1.msra.mxu0 0.0
        %2225 = vmatprep.subr.mxu0 0.0
        %2226 = vmatpush1.msra.mxu0 0.0
        %2227 = vmatprep.subr.mxu0 0.0
        %2228 = vmatpush1.msra.mxu0 0.0
        %2229 = vmatprep.subr.mxu0 0.0
        %2230 = vmatpush1.msra.mxu0 0.0
        %2231 = vmatprep.subr.mxu0 0.0
        %2232 = vmatpush1.msra.mxu0 0.0
        %2233 = vmatprep.subr.mxu0 0.0
        %2234 = vmatpush1.msra.mxu0 0.0
        %2235 = vmatprep.subr.mxu0 0.0
        %2236 = vmatpush1.msra.mxu0 0.0
        %2237 = vmatprep.subr.mxu0 0.0
        %2238 = vmatpush1.msra.mxu0 0.0
        %2239 = vmatprep.subr.mxu0 0.0
        %2240 = vmatpush1.msra.mxu0 0.0
        %2241 = vmatprep.subr.mxu0 0.0
        %2242 = vmatpush1.msra.mxu0 0.0
        %2243 = vmatprep.subr.mxu0 0.0
        %2244 = vmatpush1.msra.mxu0 0.0
        %2245 = vmatprep.subr.mxu0 0.0
        %2246 = vmatpush1.msra.mxu0 0.0
        %2247 = vmatprep.subr.mxu0 0.0
        %2248 = vmatpush1.msra.mxu0 0.0
        %2249 = vmatprep.subr.mxu0 0.0
        %2250 = vmatpush1.msra.mxu0 0.0
        %2251 = vmatprep.subr.mxu0 0.0
        %2252 = vmatpush1.msra.mxu0 0.0
        %2253 = vmatprep.subr.mxu0 0.0
        %2254 = vmatpush1.msra.mxu0 0.0
        %2255 = vmatprep.subr.mxu0 0.0
        %2256 = vmatpush1.msra.mxu0 0.0
        %2257 = vmatprep.subr.mxu0 0.0
        %2258 = vmatpush1.msra.mxu0 0.0
        %2259 = vmatprep.subr.mxu0 0.0
        %2260 = vmatpush1.msra.mxu0 0.0
        %2261 = vmatprep.subr.mxu0 0.0
        %2262 = vmatpush1.msra.mxu0 0.0
        %2263 = vmatprep.subr.mxu0 0.0
        %2264 = vmatpush1.msra.mxu0 0.0
        %2265 = vmatprep.subr.mxu0 0.0
        %2266 = vmatpush1.msra.mxu0 0.0
        %2267 = vmatprep.subr.mxu0 0.0
        %2268 = vmatpush1.msra.mxu0 0.0
        %2269 = vmatprep.subr.mxu0 0.0
        %2270 = vmatpush1.msra.mxu0 0.0
        %2271 = vmatprep.subr.mxu0 0.0
        %2272 = vmatpush1.msra.mxu0 0.0
        %2273 = vmatprep.subr.mxu0 0.0
        %2274 = vmatpush1.msra.mxu0 0.0
        %2275 = vmatprep.subr.mxu0 0.0
        %2276 = vmatpush1.msra.mxu0 0.0
        %2277 = vmatprep.mubr.f32.mxu0 0.0
        %2278 = vmatmul.mubr.f32.gmra.mrb[0].mxu0 %v2211
        %v2279 = vpop.f32.mrb[0].mxu0
        %v2280 = vadd.f32 0.0, %v2279
        %v2281 = vpop.f32.mrb[0].mxu0
        %2282 = vdwg.mxu0
        %v2284 = vsel %vm904, %v2198, 0
        %2286 = vmatprep.subr.mxu0 0.0
        %2287 = vmatpush1.msra.mxu0 %v2199
        %2288 = vmatprep.subr.mxu0 0.0
        %2289 = vmatpush1.msra.mxu0 0.0
        %2290 = vmatprep.subr.mxu0 0.0
        %2291 = vmatpush1.msra.mxu0 0.0
        %2292 = vmatprep.subr.mxu0 0.0
        %2293 = vmatpush1.msra.mxu0 0.0
        %2294 = vmatprep.subr.mxu0 0.0
        %2295 = vmatpush1.msra.mxu0 0.0
        %2296 = vmatprep.subr.mxu0 0.0
        %2297 = vmatpush1.msra.mxu0 0.0
        %2298 = vmatprep.subr.mxu0 0.0
        %2299 = vmatpush1.msra.mxu0 0.0
        %2300 = vmatprep.subr.mxu0 0.0
        %2301 = vmatpush1.msra.mxu0 0.0
        %2302 = vmatprep.subr.mxu0 0.0
        %2303 = vmatpush1.msra.mxu0 0.0
        %2304 = vmatprep.subr.mxu0 0.0
        %2305 = vmatpush1.msra.mxu0 0.0
        %2306 = vmatprep.subr.mxu0 0.0
        %2307 = vmatpush1.msra.mxu0 0.0
        %2308 = vmatprep.subr.mxu0 0.0
        %2309 = vmatpush1.msra.mxu0 0.0
        %2310 = vmatprep.subr.mxu0 0.0
        %2311 = vmatpush1.msra.mxu0 0.0
        %2312 = vmatprep.subr.mxu0 0.0
        %2313 = vmatpush1.msra.mxu0 0.0
        %2314 = vmatprep.subr.mxu0 0.0
        %2315 = vmatpush1.msra.mxu0 0.0
        %2316 = vmatprep.subr.mxu0 0.0
        %2317 = vmatpush1.msra.mxu0 0.0
        %2318 = vmatprep.subr.mxu0 0.0
        %2319 = vmatpush1.msra.mxu0 0.0
        %2320 = vmatprep.subr.mxu0 0.0
        %2321 = vmatpush1.msra.mxu0 0.0
        %2322 = vmatprep.subr.mxu0 0.0
        %2323 = vmatpush1.msra.mxu0 0.0
        %2324 = vmatprep.subr.mxu0 0.0
        %2325 = vmatpush1.msra.mxu0 0.0
        %2326 = vmatprep.subr.mxu0 0.0
        %2327 = vmatpush1.msra.mxu0 0.0
        %2328 = vmatprep.subr.mxu0 0.0
        %2329 = vmatpush1.msra.mxu0 0.0
        %2330 = vmatprep.subr.mxu0 0.0
        %2331 = vmatpush1.msra.mxu0 0.0
        %2332 = vmatprep.subr.mxu0 0.0
        %2333 = vmatpush1.msra.mxu0 0.0
        %2334 = vmatprep.subr.mxu0 0.0
        %2335 = vmatpush1.msra.mxu0 0.0
        %2336 = vmatprep.subr.mxu0 0.0
        %2337 = vmatpush1.msra.mxu0 0.0
        %2338 = vmatprep.subr.mxu0 0.0
        %2339 = vmatpush1.msra.mxu0 0.0
        %2340 = vmatprep.subr.mxu0 0.0
        %2341 = vmatpush1.msra.mxu0 0.0
        %2342 = vmatprep.subr.mxu0 0.0
        %2343 = vmatpush1.msra.mxu0 0.0
        %2344 = vmatprep.subr.mxu0 0.0
        %2345 = vmatpush1.msra.mxu0 0.0
        %2346 = vmatprep.subr.mxu0 0.0
        %2347 = vmatpush1.msra.mxu0 0.0
        %2348 = vmatprep.subr.mxu0 0.0
        %2349 = vmatpush1.msra.mxu0 0.0
        %2350 = vmatprep.mubr.f32.mxu0 0.0
        %2351 = vmatmul.mubr.f32.gmra.mrb[0].mxu0 %v2284
        %v2352 = vpop.f32.mrb[0].mxu0
        %v2353 = vadd.f32 %v2280, %v2352
        %v2354 = vpop.f32.mrb[0].mxu0
        %2355 = vdwg.mxu0
        %s2356 = scalar_lea.vmem %s17, 8
        %v2357 = vld [vmem:[%s2356] sm:$0xff]
        %2358 = vrot.lane.b32.xlu0 %v2201, 2
        %v2359 = vpop.permute.xlu0 %2358
        %2360 = vrot.lane.b32.xlu0 %v2199, 2
        %v2361 = vpop.permute.xlu0 %2360
        %v2362 = vsel %vm1227, %v2359, %v2361
        %v2365 = vsel %vm904, %v2357, 0
        %2367 = vmatprep.subr.mxu0 0.0
        %2368 = vmatpush1.msra.mxu0 %v2362
        %2369 = vmatprep.subr.mxu0 0.0
        %2370 = vmatpush1.msra.mxu0 0.0
        %2371 = vmatprep.subr.mxu0 0.0
        %2372 = vmatpush1.msra.mxu0 0.0
        %2373 = vmatprep.subr.mxu0 0.0
        %2374 = vmatpush1.msra.mxu0 0.0
        %2375 = vmatprep.subr.mxu0 0.0
        %2376 = vmatpush1.msra.mxu0 0.0
        %2377 = vmatprep.subr.mxu0 0.0
        %2378 = vmatpush1.msra.mxu0 0.0
        %2379 = vmatprep.subr.mxu0 0.0
        %2380 = vmatpush1.msra.mxu0 0.0
        %2381 = vmatprep.subr.mxu0 0.0
        %2382 = vmatpush1.msra.mxu0 0.0
        %2383 = vmatprep.subr.mxu0 0.0
        %2384 = vmatpush1.msra.mxu0 0.0
        %2385 = vmatprep.subr.mxu0 0.0
        %2386 = vmatpush1.msra.mxu0 0.0
        %2387 = vmatprep.subr.mxu0 0.0
        %2388 = vmatpush1.msra.mxu0 0.0
        %2389 = vmatprep.subr.mxu0 0.0
        %2390 = vmatpush1.msra.mxu0 0.0
        %2391 = vmatprep.subr.mxu0 0.0
        %2392 = vmatpush1.msra.mxu0 0.0
        %2393 = vmatprep.subr.mxu0 0.0
        %2394 = vmatpush1.msra.mxu0 0.0
        %2395 = vmatprep.subr.mxu0 0.0
        %2396 = vmatpush1.msra.mxu0 0.0
        %2397 = vmatprep.subr.mxu0 0.0
        %2398 = vmatpush1.msra.mxu0 0.0
        %2399 = vmatprep.subr.mxu0 0.0
        %2400 = vmatpush1.msra.mxu0 0.0
        %2401 = vmatprep.subr.mxu0 0.0
        %2402 = vmatpush1.msra.mxu0 0.0
        %2403 = vmatprep.subr.mxu0 0.0
        %2404 = vmatpush1.msra.mxu0 0.0
        %2405 = vmatprep.subr.mxu0 0.0
        %2406 = vmatpush1.msra.mxu0 0.0
        %2407 = vmatprep.subr.mxu0 0.0
        %2408 = vmatpush1.msra.mxu0 0.0
        %2409 = vmatprep.subr.mxu0 0.0
        %2410 = vmatpush1.msra.mxu0 0.0
        %2411 = vmatprep.subr.mxu0 0.0
        %2412 = vmatpush1.msra.mxu0 0.0
        %2413 = vmatprep.subr.mxu0 0.0
        %2414 = vmatpush1.msra.mxu0 0.0
        %2415 = vmatprep.subr.mxu0 0.0
        %2416 = vmatpush1.msra.mxu0 0.0
        %2417 = vmatprep.subr.mxu0 0.0
        %2418 = vmatpush1.msra.mxu0 0.0
        %2419 = vmatprep.subr.mxu0 0.0
        %2420 = vmatpush1.msra.mxu0 0.0
        %2421 = vmatprep.subr.mxu0 0.0
        %2422 = vmatpush1.msra.mxu0 0.0
        %2423 = vmatprep.subr.mxu0 0.0
        %2424 = vmatpush1.msra.mxu0 0.0
        %2425 = vmatprep.subr.mxu0 0.0
        %2426 = vmatpush1.msra.mxu0 0.0
        %2427 = vmatprep.subr.mxu0 0.0
        %2428 = vmatpush1.msra.mxu0 0.0
        %2429 = vmatprep.subr.mxu0 0.0
        %2430 = vmatpush1.msra.mxu0 0.0
        %2431 = vmatprep.mubr.f32.mxu0 0.0
        %2432 = vmatmul.mubr.f32.gmra.mrb[0].mxu0 %v2365
        %v2433 = vpop.f32.mrb[0].mxu0
        %v2434 = vadd.f32 0.0, %v2433
        %v2435 = vpop.f32.mrb[0].mxu0
        %2436 = vdwg.mxu0
        %v2437 = vadd.f32 %v2353, %v2434
        %2439 = vset.pattern.permute.xlu0 0
        %2440 = vperm.xlu0 %2439, %v1912
        %v2441 = vpop.permute.xlu0 %2440
        %v2443 = vadd.f32 %v2437, %v2441
        %v2444 = vld [vmem:[#allocation2 + $0x8] sm:$0xff]
        %v2445 = vld [vmem:[#allocation2 + $0x18] sm:$0xff]
        %v2446 = vld [vmem:[#allocation2 + $0x28] sm:$0xff]
        %2448 = vset.pattern.permute.xlu0 0
        %2449 = vperm.xlu0 %2448, %v1914
        %v2450 = vpop.permute.xlu0 %2449
        %v2453 = vsel %vm1234, %v1913, 0
        %2455 = vmatprep.subr.mxu0 0.0
        %2456 = vmatpush1.msra.mxu0 %v2444
        %2457 = vmatprep.subr.mxu0 0.0
        %2458 = vmatpush1.msra.mxu0 %v2445
        %2459 = vmatprep.subr.mxu0 0.0
        %2460 = vmatpush1.msra.mxu0 %v2446
        %2461 = vmatprep.subr.mxu0 0.0
        %2462 = vmatpush1.msra.mxu0 0.0
        %2463 = vmatprep.subr.mxu0 0.0
        %2464 = vmatpush1.msra.mxu0 0.0
        %2465 = vmatprep.subr.mxu0 0.0
        %2466 = vmatpush1.msra.mxu0 0.0
        %2467 = vmatprep.subr.mxu0 0.0
        %2468 = vmatpush1.msra.mxu0 0.0
        %2469 = vmatprep.subr.mxu0 0.0
        %2470 = vmatpush1.msra.mxu0 0.0
        %2471 = vmatprep.subr.mxu0 0.0
        %2472 = vmatpush1.msra.mxu0 0.0
        %2473 = vmatprep.subr.mxu0 0.0
        %2474 = vmatpush1.msra.mxu0 0.0
        %2475 = vmatprep.subr.mxu0 0.0
        %2476 = vmatpush1.msra.mxu0 0.0
        %2477 = vmatprep.subr.mxu0 0.0
        %2478 = vmatpush1.msra.mxu0 0.0
        %2479 = vmatprep.subr.mxu0 0.0
        %2480 = vmatpush1.msra.mxu0 0.0
        %2481 = vmatprep.subr.mxu0 0.0
        %2482 = vmatpush1.msra.mxu0 0.0
        %2483 = vmatprep.subr.mxu0 0.0
        %2484 = vmatpush1.msra.mxu0 0.0
        %2485 = vmatprep.subr.mxu0 0.0
        %2486 = vmatpush1.msra.mxu0 0.0
        %2487 = vmatprep.subr.mxu0 0.0
        %2488 = vmatpush1.msra.mxu0 0.0
        %2489 = vmatprep.subr.mxu0 0.0
        %2490 = vmatpush1.msra.mxu0 0.0
        %2491 = vmatprep.subr.mxu0 0.0
        %2492 = vmatpush1.msra.mxu0 0.0
        %2493 = vmatprep.subr.mxu0 0.0
        %2494 = vmatpush1.msra.mxu0 0.0
        %2495 = vmatprep.subr.mxu0 0.0
        %2496 = vmatpush1.msra.mxu0 0.0
        %2497 = vmatprep.subr.mxu0 0.0
        %2498 = vmatpush1.msra.mxu0 0.0
        %2499 = vmatprep.subr.mxu0 0.0
        %2500 = vmatpush1.msra.mxu0 0.0
        %2501 = vmatprep.subr.mxu0 0.0
        %2502 = vmatpush1.msra.mxu0 0.0
        %2503 = vmatprep.subr.mxu0 0.0
        %2504 = vmatpush1.msra.mxu0 0.0
        %2505 = vmatprep.subr.mxu0 0.0
        %2506 = vmatpush1.msra.mxu0 0.0
        %2507 = vmatprep.subr.mxu0 0.0
        %2508 = vmatpush1.msra.mxu0 0.0
        %2509 = vmatprep.subr.mxu0 0.0
        %2510 = vmatpush1.msra.mxu0 0.0
        %2511 = vmatprep.subr.mxu0 0.0
        %2512 = vmatpush1.msra.mxu0 0.0
        %2513 = vmatprep.subr.mxu0 0.0
        %2514 = vmatpush1.msra.mxu0 0.0
        %2515 = vmatprep.subr.mxu0 0.0
        %2516 = vmatpush1.msra.mxu0 0.0
        %2517 = vmatprep.subr.mxu0 0.0
        %2518 = vmatpush1.msra.mxu0 0.0
        %2519 = vmatprep.mubr.f32.mxu0 0.0
        %2520 = vmatmul.mubr.f32.gmra.mrb[0].mxu0 %v2453
        %v2521 = vpop.f32.mrb[0].mxu0
        %v2522 = vadd.f32 %v2450, %v2521
        %v2523 = vpop.f32.mrb[0].mxu0
        %2524 = vdwg.mxu0
        %v2525 = vadd.f32 %v2443, %v2522
        %v2526 = vmax.f32 %v2525, 0.0
        %2527 = vst [vmem:[%s662] sm:$0xff] %v2526
        %s2528 = sand.u32 %s494, 1
        %s2529 = scalar_lea.sflag [#allocation5], %s2528
        %s2530 = sand.u32 %s494, 1
        %s2531 = smul.addr %s2530, 8
        %s2532 = scalar_lea.vmem [#allocation4], %s2531
        // Predicated region
        $region105: #{ecgformer_forward.1} parent=103 // pred_check
          %p2533 = pneg %p504
        $region106: #{ecgformer_forward.1} parent=103 // pred_check_branch
          %2535 = sbr.rel (%p2533) target = $region108
        $region107: #{ecgformer_forward.1} parent=103 // pred_region
          %s2537 = ssub.s32 128, 128
          %2538 = vsyncadd %s2529, %s2537
          %s2539 = smul.addr %s35, 128
          %s2540 = scalar_lea.hbm %s21, %s2539
          %s2542 = sshll.u32 %s2532, 4
          %s2543 = int_to_ptr.vmem [resolvable:$true] %s2542
          %2545 = dma.vmem_to_hbm [thread:$0]  %s2543, 128, %s2540, %s2529
        $region108: #{ecgformer_forward.1} parent=103 // pred_fallthru
          _
      $region104: #{ecgformer_forward.1} parent=5 // pred_fallthru
        _
      %p2546 = scmp.le.s32.totalorder 2, %s30
      // Predicated region
      $region109: #{ecgformer_forward.1} parent=5 // pred_check
        %p2547 = pneg %p2546
      $region110: #{ecgformer_forward.1} parent=5 // pred_check_branch
        %2549 = sbr.rel (%p2547) target = $region112
      $region111: #{ecgformer_forward.1} parent=5 // pred_region
        %s2550 = ssub.s32 %s30, 2
        // Predicated region
        $region113: #{ecgformer_forward.1} parent=111 // pred_check
          %p2551 = pneg %p510
        $region114: #{ecgformer_forward.1} parent=111 // pred_check_branch
          %2553 = sbr.rel (%p2551) target = $region116
        $region115: #{ecgformer_forward.1} parent=111 // pred_region
          %s2554 = sand.u32 %s495, 1
          %s2555 = scalar_lea.sflag [#allocation5], %s2554
          %s2556 = sand.u32 %s495, 1
          %s2557 = smul.addr %s2556, 8
          %s2558 = scalar_lea.vmem [#allocation4], %s2557
          %2559 = dma.done %s2555, 128
        $region116: #{ecgformer_forward.1} parent=111 // pred_fallthru
          _
      $region112: #{ecgformer_forward.1} parent=5 // pred_fallthru
        _
    $region6: #{ecgformer_forward.1} parent=1 // loop_footer
      %s34 = sadd.s32 1, %s30
    $region7: #{ecgformer_forward.1} parent=1 // loop_footer_branch
      %29 = sbr.rel target = $region3
    $region8: #{ecgformer_forward.1} parent=1 // loop_exit
      _
    %2560 = vsyncpa [#allocation5], 1
    %s2561 = scalar_lea.sflag [#allocation5], 1
    %2562 = vsyncpa %s2561, 1

</llo_original>
